<compile_context>
chip_gen: v7x
topology: tpu7x:2x2x1
jax: 0.10.0
libtpu: 0.0.40
codegen_flags: <defaults>
</compile_context>

<pallas_src>
import math

import jax
import jax.numpy as jnp
import numpy as np
from jax import lax
from jax.experimental import pallas as pl
from jax.experimental.pallas import tpu as pltpu


def _lstm_decoder_kernel(x_ref, h0_ref, c0_ref, wih0_ref, b0_ref, whh0_ref,
                         wih1_ref, whh1_ref, b1_ref, out_ref, xg0_ref):
    T, B, H = out_ref.shape
    f32 = jnp.float32
    bf16 = jnp.bfloat16

    whh0 = whh0_ref[...]      # (H, 4H)  bf16, layer-0 recurrent weight^T
    wih1 = wih1_ref[...]      # (H, 4H)  bf16, layer-1 input weight^T
    whh1 = whh1_ref[...]      # (H, 4H)  bf16, layer-1 recurrent weight^T

    # ---- Prologue: layer-0 input projection for ALL timesteps, off the
    # recurrent critical path. One (T*B, F) @ (F, 4H) MXU op + bias add,
    # staged into VMEM scratch (f32). ----
    xg0_ref[...] = (
        jnp.dot(x_ref[...], wih0_ref[...], preferred_element_type=f32)
        + b0_ref[...])

    # Hoist the layer-1 bias broadcast out of the unrolled loop.
    b1b = jnp.broadcast_to(b1_ref[...], (B, 4 * H))

    def gates_to_hc(gates, c_prev):
        # One full-width sigmoid over the whole (B, 4H) tile; the g gate uses
        # tanh(z) = 2*sigmoid(2z) - 1 (g columns were pre-scaled by 2), so no
        # extra EUP pass for tanh(g). PyTorch gate order: [i, f, g, o].
        sig = jax.nn.sigmoid(gates)
        i_g = sig[:, 0 * H:1 * H]
        f_g = sig[:, 1 * H:2 * H]
        g_g = 2.0 * sig[:, 2 * H:3 * H] - 1.0
        o_g = sig[:, 3 * H:4 * H]
        c_new = f_g * c_prev + i_g * g_g
        h_new = o_g * jnp.tanh(c_new)
        return h_new, c_new

    def step(t, carry):
        h0_, c0_, h1_, c1_ = carry
        # ---- layer 0: staged x-projection + recurrent matmul (bf16 operands,
        # f32 accumulation). ----
        row = pl.multiple_of(t * B, B)
        g0 = xg0_ref[pl.ds(row, B), :] + jnp.dot(
            h0_.astype(bf16), whh0, preferred_element_type=f32)
        h0n, c0n = gates_to_hc(g0, c0_)
        # ---- layer 1: two independent dots (no lane concat); the whh1 dot
        # depends only on the previous step and overlaps layer-0's chain.
        # Eval semantics: no inter-layer dropout. ----
        g1 = (jnp.dot(h0n.astype(bf16), wih1, preferred_element_type=f32)
              + jnp.dot(h1_.astype(bf16), whh1, preferred_element_type=f32)
              + b1b)
        h1n, c1n = gates_to_hc(g1, c1_)
        # Per-step store into the VMEM-resident output slab; single HBM
        # writeback at the end of the invocation.
        out_ref[t] = h1n
        return (h0n, c0n, h1n, c1n)

    init = (h0_ref[0], c0_ref[0], h0_ref[1], c0_ref[1])
    lax.fori_loop(0, T, step, init, unroll=True)


def decoder_forward(dec_input, h0, c0, params):
    """2-layer LSTM forward. dec_input: (T, B, F); h0, c0: (2, B, H)."""
    T, B, F = dec_input.shape
    H = h0.shape[-1]
    (w_ih0, w_hh0, b_ih0, b_hh0, w_ih1, w_hh1, b_ih1, b_hh1) = params

    def scale_g(a):
        # Double the g-gate block so the kernel can use tanh(z)=2*sigmoid(2z)-1.
        return a.at[..., 2 * H:3 * H].multiply(2.0)

    bf16 = jnp.bfloat16
    # Pre-transpose weights, fuse the two additive biases (exact), pre-scale the
    # g-gate columns by 2 (exact), and cast MXU operands to bf16.
    wih0_t = scale_g(w_ih0.T).astype(bf16)            # (F, 4H)
    whh0_t = scale_g(w_hh0.T).astype(bf16)            # (H, 4H)
    b0 = scale_g(b_ih0 + b_hh0)[None, :]              # (1, 4H) f32
    wih1_t = scale_g(w_ih1.T).astype(bf16)            # (H, 4H)
    whh1_t = scale_g(w_hh1.T).astype(bf16)            # (H, 4H)
    b1 = scale_g(b_ih1 + b_hh1)[None, :]              # (1, 4H) f32

    x2d = dec_input.reshape(T * B, F).astype(bf16)    # flat rows for the prologue matmul

    grid_spec = pltpu.PrefetchScalarGridSpec(
        num_scalar_prefetch=0,
        grid=(1,),                     # single invocation; time loop in-kernel
        in_specs=[
            pl.BlockSpec((T * B, F), lambda i: (0, 0)),        # dec_input, flattened
            pl.BlockSpec((2, B, H), lambda i: (0, 0, 0)),      # h0 (both layers)
            pl.BlockSpec((2, B, H), lambda i: (0, 0, 0)),      # c0 (both layers)
            pl.BlockSpec((F, 4 * H), lambda i: (0, 0)),        # W_ih_l0^T (bf16)
            pl.BlockSpec((1, 4 * H), lambda i: (0, 0)),        # b_l0 (= b_ih + b_hh)
            pl.BlockSpec((H, 4 * H), lambda i: (0, 0)),        # W_hh_l0^T (bf16)
            pl.BlockSpec((H, 4 * H), lambda i: (0, 0)),        # W_ih_l1^T (bf16)
            pl.BlockSpec((H, 4 * H), lambda i: (0, 0)),        # W_hh_l1^T (bf16)
            pl.BlockSpec((1, 4 * H), lambda i: (0, 0)),        # b_l1 (= b_ih + b_hh)
        ],
        out_specs=pl.BlockSpec((T, B, H), lambda i: (0, 0, 0)),
        scratch_shapes=[pltpu.VMEM((T * B, 4 * H), jnp.float32)],  # staged x-gates
    )

    return pl.pallas_call(
        _lstm_decoder_kernel,
        out_shape=jax.ShapeDtypeStruct((T, B, H), jnp.float32),
        grid_spec=grid_spec,
        compiler_params=pltpu.CompilerParams(
            dimension_semantics=("arbitrary",)),   # recurrence is sequential
    )(x2d, h0, c0, wih0_t, b0, whh0_t, wih1_t, whh1_t, b1)


def decoder_forward_ref(dec_input, h0, c0, params):
    """Pure-JAX exact-f32 reference (lax.scan) for correctness checking."""
    (w_ih0, w_hh0, b_ih0, b_hh0, w_ih1, w_hh1, b_ih1, b_hh1) = params

    def cell(x_t, h, c, w_ih, w_hh, b_ih, b_hh):
        g = x_t @ w_ih.T + h @ w_hh.T + b_ih + b_hh
        i_g, f_g, g_g, o_g = jnp.split(g, 4, axis=-1)
        c_new = jax.nn.sigmoid(f_g) * c + jax.nn.sigmoid(i_g) * jnp.tanh(g_g)
        h_new = jax.nn.sigmoid(o_g) * jnp.tanh(c_new)
        return h_new, c_new

    def step(carry, x_t):
        h0_, c0_, h1_, c1_ = carry
        h0n, c0n = cell(x_t, h0_, c0_, w_ih0, w_hh0, b_ih0, b_hh0)
        # eval-mode: no inter-layer dropout
        h1n, c1n = cell(h0n, h1_, c1_, w_ih1, w_hh1, b_ih1, b_hh1)
        return (h0n, c0n, h1n, c1n), h1n

    carry0 = (h0[0], c0[0], h0[1], c0[1])
    _, ys = lax.scan(step, carry0, dec_input)
    return ys


def init_params(key, in_features, hidden_size):
    """Deterministic PyTorch-style LSTM init: U(-1/sqrt(H), 1/sqrt(H))."""
    H = hidden_size
    bound = 1.0 / math.sqrt(H)
    ks = jax.random.split(key, 8)
    u = lambda k, shape: jax.random.uniform(k, shape, jnp.float32, -bound, bound)
    w_ih0 = u(ks[0], (4 * H, in_features))
    w_hh0 = u(ks[1], (4 * H, H))
    b_ih0 = u(ks[2], (4 * H,))
    b_hh0 = u(ks[3], (4 * H,))
    w_ih1 = u(ks[4], (4 * H, H))      # layer-1 input size == H
    w_hh1 = u(ks[5], (4 * H, H))
    b_ih1 = u(ks[6], (4 * H,))
    b_hh1 = u(ks[7], (4 * H,))
    return (w_ih0, w_hh0, b_ih0, b_hh0, w_ih1, w_hh1, b_ih1, b_hh1)


if __name__ == "__main__":
    in_features = 16
    hidden_size = 32
    seq_len = 6
    batch = 8

    key = jax.random.PRNGKey(0)
    k_x, k_h, k_c, k_p = jax.random.split(key, 4)

    dec_input = jax.random.normal(k_x, (seq_len, batch, in_features), jnp.float32)
    h0 = jax.random.normal(k_h, (2, batch, hidden_size), jnp.float32)
    c0 = jax.random.normal(k_c, (2, batch, hidden_size), jnp.float32)
    params = init_params(k_p, in_features, hidden_size)

    out = jax.jit(decoder_forward)(dec_input, h0, c0, params)
    out = jax.block_until_ready(out)

    ref = jax.block_until_ready(decoder_forward_ref(dec_input, h0, c0, params))
    # bf16 MXU operands (f32 accumulation) vs exact-f32 reference -> loosened tol.
    np.testing.assert_allclose(np.asarray(out), np.asarray(ref),
                               rtol=3e-2, atol=3e-2)
    print("KERNEL_OK")
</pallas_src>

<mosaic_0001>
module attributes {stable_mosaic.version = 11 : i64} {
  func.func @_lstm_decoder_kernel(%arg0: i32, %arg1: memref<48x16xbf16, #tpu.memory_space<vmem>>, %arg2: memref<2x8x32xf32, #tpu.memory_space<vmem>>, %arg3: memref<2x8x32xf32, #tpu.memory_space<vmem>>, %arg4: memref<16x128xbf16, #tpu.memory_space<vmem>>, %arg5: memref<1x128xf32, #tpu.memory_space<vmem>>, %arg6: memref<32x128xbf16, #tpu.memory_space<vmem>>, %arg7: memref<32x128xbf16, #tpu.memory_space<vmem>>, %arg8: memref<32x128xbf16, #tpu.memory_space<vmem>>, %arg9: memref<1x128xf32, #tpu.memory_space<vmem>>, %arg10: memref<6x8x32xf32, #tpu.memory_space<vmem>>, %arg11: memref<48x128xf32, #tpu.memory_space<vmem>>) attributes {dimension_semantics = [#tpu.dimension_semantics<arbitrary>], iteration_bounds = array<i64: 1>, scalar_prefetch = 0 : i64, scratch_operands = 1 : i64, tpu.core_type = #tpu.core_type<tc>, window_params = [{pipeline_mode = #tpu.pipeline_mode<synchronous>, transform_indices = @transform_0, window_bounds = array<i64: 48, 16>}, {pipeline_mode = #tpu.pipeline_mode<synchronous>, transform_indices = @transform_1, window_bounds = array<i64: 2, 8, 32>}, {pipeline_mode = #tpu.pipeline_mode<synchronous>, transform_indices = @transform_2, window_bounds = array<i64: 2, 8, 32>}, {pipeline_mode = #tpu.pipeline_mode<synchronous>, transform_indices = @transform_3, window_bounds = array<i64: 16, 128>}, {pipeline_mode = #tpu.pipeline_mode<synchronous>, transform_indices = @transform_4, window_bounds = array<i64: 1, 128>}, {pipeline_mode = #tpu.pipeline_mode<synchronous>, transform_indices = @transform_5, window_bounds = array<i64: 32, 128>}, {pipeline_mode = #tpu.pipeline_mode<synchronous>, transform_indices = @transform_6, window_bounds = array<i64: 32, 128>}, {pipeline_mode = #tpu.pipeline_mode<synchronous>, transform_indices = @transform_7, window_bounds = array<i64: 32, 128>}, {pipeline_mode = #tpu.pipeline_mode<synchronous>, transform_indices = @transform_8, window_bounds = array<i64: 1, 128>}, {pipeline_mode = #tpu.pipeline_mode<synchronous>, transform_indices = @transform_9, window_bounds = array<i64: 6, 8, 32>}]} {
    %c0 = arith.constant 0 : index
    %c0_0 = arith.constant 0 : index
    %0 = vector.load %arg6[%c0, %c0_0] : memref<32x128xbf16, #tpu.memory_space<vmem>>, vector<32x128xbf16>
    %c0_1 = arith.constant 0 : index
    %c0_2 = arith.constant 0 : index
    %1 = vector.load %arg7[%c0_1, %c0_2] : memref<32x128xbf16, #tpu.memory_space<vmem>>, vector<32x128xbf16>
    %c0_3 = arith.constant 0 : index
    %c0_4 = arith.constant 0 : index
    %2 = vector.load %arg8[%c0_3, %c0_4] : memref<32x128xbf16, #tpu.memory_space<vmem>>, vector<32x128xbf16>
    %c0_5 = arith.constant 0 : index
    %c0_6 = arith.constant 0 : index
    %3 = vector.load %arg1[%c0_5, %c0_6] : memref<48x16xbf16, #tpu.memory_space<vmem>>, vector<48x16xbf16>
    %c0_7 = arith.constant 0 : index
    %c0_8 = arith.constant 0 : index
    %4 = vector.load %arg4[%c0_7, %c0_8] : memref<16x128xbf16, #tpu.memory_space<vmem>>, vector<16x128xbf16>
    %cst = arith.constant dense<0.000000e+00> : vector<48x128xf32>
    %5 = tpu.matmul %3, %4, %cst {dimension_numbers = #tpu.dot_dimension_numbers<[1], [0], [0], [1], [0, 0, 1, 1], [], []>} : vector<48x16xbf16>, vector<16x128xbf16>, vector<48x128xf32> -> vector<48x128xf32>
    %c0_9 = arith.constant 0 : index
    %c0_10 = arith.constant 0 : index
    %6 = vector.load %arg5[%c0_9, %c0_10] : memref<1x128xf32, #tpu.memory_space<vmem>>, vector<1x128xf32>
    %7 = vector.broadcast %6 : vector<1x128xf32> to vector<48x128xf32>
    %8 = arith.addf %5, %7 : vector<48x128xf32>
    %c0_11 = arith.constant 0 : index
    %c0_12 = arith.constant 0 : index
    %9 = vector.load %arg11[%c0_11, %c0_12] : memref<48x128xf32, #tpu.memory_space<vmem>>, vector<48x128xf32>
    tpu.vector_store %arg11[%c0_11, %c0_12], %8 {strides = array<i32>} : memref<48x128xf32, #tpu.memory_space<vmem>>, vector<48x128xf32>,
    %c0_13 = arith.constant 0 : index
    %c0_14 = arith.constant 0 : index
    %10 = vector.load %arg9[%c0_13, %c0_14] : memref<1x128xf32, #tpu.memory_space<vmem>>, vector<1x128xf32>
    %11 = vector.shape_cast %10 : vector<1x128xf32> to vector<1x128xf32>
    %12 = vector.broadcast %11 : vector<1x128xf32> to vector<8x128xf32>
    %c0_15 = arith.constant 0 : index
    %c0_16 = arith.constant 0 : index
    %c0_17 = arith.constant 0 : index
    %13 = vector.load %arg2[%c0_15, %c0_16, %c0_17] : memref<2x8x32xf32, #tpu.memory_space<vmem>>, vector<1x8x32xf32>
    %14 = vector.shape_cast %13 : vector<1x8x32xf32> to vector<8x32xf32>
    %c0_18 = arith.constant 0 : index
    %c0_19 = arith.constant 0 : index
    %c0_20 = arith.constant 0 : index
    %15 = vector.load %arg3[%c0_18, %c0_19, %c0_20] : memref<2x8x32xf32, #tpu.memory_space<vmem>>, vector<1x8x32xf32>
    %16 = vector.shape_cast %15 : vector<1x8x32xf32> to vector<8x32xf32>
    %c1 = arith.constant 1 : index
    %c0_21 = arith.constant 0 : index
    %c0_22 = arith.constant 0 : index
    %17 = vector.load %arg2[%c1, %c0_21, %c0_22] : memref<2x8x32xf32, #tpu.memory_space<vmem>>, vector<1x8x32xf32>
    %18 = vector.shape_cast %17 : vector<1x8x32xf32> to vector<8x32xf32>
    %c1_23 = arith.constant 1 : index
    %c0_24 = arith.constant 0 : index
    %c0_25 = arith.constant 0 : index
    %19 = vector.load %arg3[%c1_23, %c0_24, %c0_25] : memref<2x8x32xf32, #tpu.memory_space<vmem>>, vector<1x8x32xf32>
    %20 = vector.shape_cast %19 : vector<1x8x32xf32> to vector<8x32xf32>
    %c0_i32 = arith.constant 0 : i32
    %c8_i32 = arith.constant 8 : i32
    %21 = arith.muli %c0_i32, %c8_i32 : i32
    %22 = tpu.assume_multiple %21, 8 : i32
    %23 = arith.index_cast %22 : i32 to index
    %c0_26 = arith.constant 0 : index
    %24 = vector.load %arg11[%23, %c0_26] : memref<48x128xf32, #tpu.memory_space<vmem>>, vector<8x128xf32>
    %25 = arith.truncf %14 : vector<8x32xf32> to vector<8x32xbf16>
    %cst_27 = arith.constant dense<0.000000e+00> : vector<8x128xf32>
    %26 = tpu.matmul %25, %0, %cst_27 {dimension_numbers = #tpu.dot_dimension_numbers<[1], [0], [0], [1], [0, 0, 1, 1], [], []>} : vector<8x32xbf16>, vector<32x128xbf16>, vector<8x128xf32> -> vector<8x128xf32>
    %27 = arith.addf %24, %26 : vector<8x128xf32>
    %28 = arith.negf %27 : vector<8x128xf32>
    %29 = math.exp %28 : vector<8x128xf32>
    %cst_28 = arith.constant 1.000000e+00 : f32
    %30 = vector.broadcast %cst_28 : f32 to vector<8x128xf32>
    %31 = arith.addf %30, %29 : vector<8x128xf32>
    %32 = arith.divf %30, %31 : vector<8x128xf32>
    %33 = vector.extract_strided_slice %32 {offsets = [0, 0], sizes = [8, 32], strides = [1, 1]} : vector<8x128xf32> to vector<8x32xf32>
    %34 = vector.extract_strided_slice %32 {offsets = [0, 32], sizes = [8, 32], strides = [1, 1]} : vector<8x128xf32> to vector<8x32xf32>
    %35 = vector.extract_strided_slice %32 {offsets = [0, 64], sizes = [8, 32], strides = [1, 1]} : vector<8x128xf32> to vector<8x32xf32>
    %cst_29 = arith.constant 2.000000e+00 : f32
    %36 = vector.broadcast %cst_29 : f32 to vector<8x32xf32>
    %37 = arith.mulf %36, %35 : vector<8x32xf32>
    %cst_30 = arith.constant 1.000000e+00 : f32
    %38 = vector.broadcast %cst_30 : f32 to vector<8x32xf32>
    %39 = arith.subf %37, %38 : vector<8x32xf32>
    %40 = vector.extract_strided_slice %32 {offsets = [0, 96], sizes = [8, 32], strides = [1, 1]} : vector<8x128xf32> to vector<8x32xf32>
    %41 = arith.mulf %34, %16 : vector<8x32xf32>
    %42 = arith.mulf %33, %39 : vector<8x32xf32>
    %43 = arith.addf %41, %42 : vector<8x32xf32>
    %44 = math.tanh %43 : vector<8x32xf32>
    %45 = arith.mulf %40, %44 : vector<8x32xf32>
    %46 = arith.truncf %45 : vector<8x32xf32> to vector<8x32xbf16>
    %cst_31 = arith.constant dense<0.000000e+00> : vector<8x128xf32>
    %47 = tpu.matmul %46, %1, %cst_31 {dimension_numbers = #tpu.dot_dimension_numbers<[1], [0], [0], [1], [0, 0, 1, 1], [], []>} : vector<8x32xbf16>, vector<32x128xbf16>, vector<8x128xf32> -> vector<8x128xf32>
    %48 = arith.truncf %18 : vector<8x32xf32> to vector<8x32xbf16>
    %cst_32 = arith.constant dense<0.000000e+00> : vector<8x128xf32>
    %49 = tpu.matmul %48, %2, %cst_32 {dimension_numbers = #tpu.dot_dimension_numbers<[1], [0], [0], [1], [0, 0, 1, 1], [], []>} : vector<8x32xbf16>, vector<32x128xbf16>, vector<8x128xf32> -> vector<8x128xf32>
    %50 = arith.addf %47, %49 : vector<8x128xf32>
    %51 = arith.addf %50, %12 : vector<8x128xf32>
    %52 = arith.negf %51 : vector<8x128xf32>
    %53 = math.exp %52 : vector<8x128xf32>
    %cst_33 = arith.constant 1.000000e+00 : f32
    %54 = vector.broadcast %cst_33 : f32 to vector<8x128xf32>
    %55 = arith.addf %54, %53 : vector<8x128xf32>
    %56 = arith.divf %54, %55 : vector<8x128xf32>
    %57 = vector.extract_strided_slice %56 {offsets = [0, 0], sizes = [8, 32], strides = [1, 1]} : vector<8x128xf32> to vector<8x32xf32>
    %58 = vector.extract_strided_slice %56 {offsets = [0, 32], sizes = [8, 32], strides = [1, 1]} : vector<8x128xf32> to vector<8x32xf32>
    %59 = vector.extract_strided_slice %56 {offsets = [0, 64], sizes = [8, 32], strides = [1, 1]} : vector<8x128xf32> to vector<8x32xf32>
    %cst_34 = arith.constant 2.000000e+00 : f32
    %60 = vector.broadcast %cst_34 : f32 to vector<8x32xf32>
    %61 = arith.mulf %60, %59 : vector<8x32xf32>
    %cst_35 = arith.constant 1.000000e+00 : f32
    %62 = vector.broadcast %cst_35 : f32 to vector<8x32xf32>
    %63 = arith.subf %61, %62 : vector<8x32xf32>
    %64 = vector.extract_strided_slice %56 {offsets = [0, 96], sizes = [8, 32], strides = [1, 1]} : vector<8x128xf32> to vector<8x32xf32>
    %65 = arith.mulf %58, %20 : vector<8x32xf32>
    %66 = arith.mulf %57, %63 : vector<8x32xf32>
    %67 = arith.addf %65, %66 : vector<8x32xf32>
    %68 = math.tanh %67 : vector<8x32xf32>
    %69 = arith.mulf %64, %68 : vector<8x32xf32>
    %70 = arith.index_cast %c0_i32 : i32 to index
    %c0_36 = arith.constant 0 : index
    %c0_37 = arith.constant 0 : index
    %71 = vector.load %arg10[%70, %c0_36, %c0_37] : memref<6x8x32xf32, #tpu.memory_space<vmem>>, vector<1x8x32xf32>
    %72 = vector.shape_cast %71 : vector<1x8x32xf32> to vector<8x32xf32>
    %73 = vector.shape_cast %69 : vector<8x32xf32> to vector<1x8x32xf32>
    tpu.vector_store %arg10[%70, %c0_36, %c0_37], %73 {strides = array<i32>} : memref<6x8x32xf32, #tpu.memory_space<vmem>>, vector<1x8x32xf32>,
    %c1_i32 = arith.constant 1 : i32
    %c8_i32_38 = arith.constant 8 : i32
    %74 = arith.muli %c1_i32, %c8_i32_38 : i32
    %75 = tpu.assume_multiple %74, 8 : i32
    %76 = arith.index_cast %75 : i32 to index
    %c0_39 = arith.constant 0 : index
    %77 = vector.load %arg11[%76, %c0_39] : memref<48x128xf32, #tpu.memory_space<vmem>>, vector<8x128xf32>
    %78 = arith.truncf %45 : vector<8x32xf32> to vector<8x32xbf16>
    %cst_40 = arith.constant dense<0.000000e+00> : vector<8x128xf32>
    %79 = tpu.matmul %78, %0, %cst_40 {dimension_numbers = #tpu.dot_dimension_numbers<[1], [0], [0], [1], [0, 0, 1, 1], [], []>} : vector<8x32xbf16>, vector<32x128xbf16>, vector<8x128xf32> -> vector<8x128xf32>
    %80 = arith.addf %77, %79 : vector<8x128xf32>
    %81 = arith.negf %80 : vector<8x128xf32>
    %82 = math.exp %81 : vector<8x128xf32>
    %cst_41 = arith.constant 1.000000e+00 : f32
    %83 = vector.broadcast %cst_41 : f32 to vector<8x128xf32>
    %84 = arith.addf %83, %82 : vector<8x128xf32>
    %85 = arith.divf %83, %84 : vector<8x128xf32>
    %86 = vector.extract_strided_slice %85 {offsets = [0, 0], sizes = [8, 32], strides = [1, 1]} : vector<8x128xf32> to vector<8x32xf32>
    %87 = vector.extract_strided_slice %85 {offsets = [0, 32], sizes = [8, 32], strides = [1, 1]} : vector<8x128xf32> to vector<8x32xf32>
    %88 = vector.extract_strided_slice %85 {offsets = [0, 64], sizes = [8, 32], strides = [1, 1]} : vector<8x128xf32> to vector<8x32xf32>
    %cst_42 = arith.constant 2.000000e+00 : f32
    %89 = vector.broadcast %cst_42 : f32 to vector<8x32xf32>
    %90 = arith.mulf %89, %88 : vector<8x32xf32>
    %cst_43 = arith.constant 1.000000e+00 : f32
    %91 = vector.broadcast %cst_43 : f32 to vector<8x32xf32>
    %92 = arith.subf %90, %91 : vector<8x32xf32>
    %93 = vector.extract_strided_slice %85 {offsets = [0, 96], sizes = [8, 32], strides = [1, 1]} : vector<8x128xf32> to vector<8x32xf32>
    %94 = arith.mulf %87, %43 : vector<8x32xf32>
    %95 = arith.mulf %86, %92 : vector<8x32xf32>
    %96 = arith.addf %94, %95 : vector<8x32xf32>
    %97 = math.tanh %96 : vector<8x32xf32>
    %98 = arith.mulf %93, %97 : vector<8x32xf32>
    %99 = arith.truncf %98 : vector<8x32xf32> to vector<8x32xbf16>
    %cst_44 = arith.constant dense<0.000000e+00> : vector<8x128xf32>
    %100 = tpu.matmul %99, %1, %cst_44 {dimension_numbers = #tpu.dot_dimension_numbers<[1], [0], [0], [1], [0, 0, 1, 1], [], []>} : vector<8x32xbf16>, vector<32x128xbf16>, vector<8x128xf32> -> vector<8x128xf32>
    %101 = arith.truncf %69 : vector<8x32xf32> to vector<8x32xbf16>
    %cst_45 = arith.constant dense<0.000000e+00> : vector<8x128xf32>
    %102 = tpu.matmul %101, %2, %cst_45 {dimension_numbers = #tpu.dot_dimension_numbers<[1], [0], [0], [1], [0, 0, 1, 1], [], []>} : vector<8x32xbf16>, vector<32x128xbf16>, vector<8x128xf32> -> vector<8x128xf32>
    %103 = arith.addf %100, %102 : vector<8x128xf32>
    %104 = arith.addf %103, %12 : vector<8x128xf32>
    %105 = arith.negf %104 : vector<8x128xf32>
    %106 = math.exp %105 : vector<8x128xf32>
    %cst_46 = arith.constant 1.000000e+00 : f32
    %107 = vector.broadcast %cst_46 : f32 to vector<8x128xf32>
    %108 = arith.addf %107, %106 : vector<8x128xf32>
    %109 = arith.divf %107, %108 : vector<8x128xf32>
    %110 = vector.extract_strided_slice %109 {offsets = [0, 0], sizes = [8, 32], strides = [1, 1]} : vector<8x128xf32> to vector<8x32xf32>
    %111 = vector.extract_strided_slice %109 {offsets = [0, 32], sizes = [8, 32], strides = [1, 1]} : vector<8x128xf32> to vector<8x32xf32>
    %112 = vector.extract_strided_slice %109 {offsets = [0, 64], sizes = [8, 32], strides = [1, 1]} : vector<8x128xf32> to vector<8x32xf32>
    %cst_47 = arith.constant 2.000000e+00 : f32
    %113 = vector.broadcast %cst_47 : f32 to vector<8x32xf32>
    %114 = arith.mulf %113, %112 : vector<8x32xf32>
    %cst_48 = arith.constant 1.000000e+00 : f32
    %115 = vector.broadcast %cst_48 : f32 to vector<8x32xf32>
    %116 = arith.subf %114, %115 : vector<8x32xf32>
    %117 = vector.extract_strided_slice %109 {offsets = [0, 96], sizes = [8, 32], strides = [1, 1]} : vector<8x128xf32> to vector<8x32xf32>
    %118 = arith.mulf %111, %67 : vector<8x32xf32>
    %119 = arith.mulf %110, %116 : vector<8x32xf32>
    %120 = arith.addf %118, %119 : vector<8x32xf32>
    %121 = math.tanh %120 : vector<8x32xf32>
    %122 = arith.mulf %117, %121 : vector<8x32xf32>
    %123 = arith.index_cast %c1_i32 : i32 to index
    %c0_49 = arith.constant 0 : index
    %c0_50 = arith.constant 0 : index
    %124 = vector.load %arg10[%123, %c0_49, %c0_50] : memref<6x8x32xf32, #tpu.memory_space<vmem>>, vector<1x8x32xf32>
    %125 = vector.shape_cast %124 : vector<1x8x32xf32> to vector<8x32xf32>
    %126 = vector.shape_cast %122 : vector<8x32xf32> to vector<1x8x32xf32>
    tpu.vector_store %arg10[%123, %c0_49, %c0_50], %126 {strides = array<i32>} : memref<6x8x32xf32, #tpu.memory_space<vmem>>, vector<1x8x32xf32>,
    %c2_i32 = arith.constant 2 : i32
    %c8_i32_51 = arith.constant 8 : i32
    %127 = arith.muli %c2_i32, %c8_i32_51 : i32
    %128 = tpu.assume_multiple %127, 8 : i32
    %129 = arith.index_cast %128 : i32 to index
    %c0_52 = arith.constant 0 : index
    %130 = vector.load %arg11[%129, %c0_52] : memref<48x128xf32, #tpu.memory_space<vmem>>, vector<8x128xf32>
    %131 = arith.truncf %98 : vector<8x32xf32> to vector<8x32xbf16>
    %cst_53 = arith.constant dense<0.000000e+00> : vector<8x128xf32>
    %132 = tpu.matmul %131, %0, %cst_53 {dimension_numbers = #tpu.dot_dimension_numbers<[1], [0], [0], [1], [0, 0, 1, 1], [], []>} : vector<8x32xbf16>, vector<32x128xbf16>, vector<8x128xf32> -> vector<8x128xf32>
    %133 = arith.addf %130, %132 : vector<8x128xf32>
    %134 = arith.negf %133 : vector<8x128xf32>
    %135 = math.exp %134 : vector<8x128xf32>
    %cst_54 = arith.constant 1.000000e+00 : f32
    %136 = vector.broadcast %cst_54 : f32 to vector<8x128xf32>
    %137 = arith.addf %136, %135 : vector<8x128xf32>
    %138 = arith.divf %136, %137 : vector<8x128xf32>
    %139 = vector.extract_strided_slice %138 {offsets = [0, 0], sizes = [8, 32], strides = [1, 1]} : vector<8x128xf32> to vector<8x32xf32>
    %140 = vector.extract_strided_slice %138 {offsets = [0, 32], sizes = [8, 32], strides = [1, 1]} : vector<8x128xf32> to vector<8x32xf32>
    %141 = vector.extract_strided_slice %138 {offsets = [0, 64], sizes = [8, 32], strides = [1, 1]} : vector<8x128xf32> to vector<8x32xf32>
    %cst_55 = arith.constant 2.000000e+00 : f32
    %142 = vector.broadcast %cst_55 : f32 to vector<8x32xf32>
    %143 = arith.mulf %142, %141 : vector<8x32xf32>
    %cst_56 = arith.constant 1.000000e+00 : f32
    %144 = vector.broadcast %cst_56 : f32 to vector<8x32xf32>
    %145 = arith.subf %143, %144 : vector<8x32xf32>
    %146 = vector.extract_strided_slice %138 {offsets = [0, 96], sizes = [8, 32], strides = [1, 1]} : vector<8x128xf32> to vector<8x32xf32>
    %147 = arith.mulf %140, %96 : vector<8x32xf32>
    %148 = arith.mulf %139, %145 : vector<8x32xf32>
    %149 = arith.addf %147, %148 : vector<8x32xf32>
    %150 = math.tanh %149 : vector<8x32xf32>
    %151 = arith.mulf %146, %150 : vector<8x32xf32>
    %152 = arith.truncf %151 : vector<8x32xf32> to vector<8x32xbf16>
    %cst_57 = arith.constant dense<0.000000e+00> : vector<8x128xf32>
    %153 = tpu.matmul %152, %1, %cst_57 {dimension_numbers = #tpu.dot_dimension_numbers<[1], [0], [0], [1], [0, 0, 1, 1], [], []>} : vector<8x32xbf16>, vector<32x128xbf16>, vector<8x128xf32> -> vector<8x128xf32>
    %154 = arith.truncf %122 : vector<8x32xf32> to vector<8x32xbf16>
    %cst_58 = arith.constant dense<0.000000e+00> : vector<8x128xf32>
    %155 = tpu.matmul %154, %2, %cst_58 {dimension_numbers = #tpu.dot_dimension_numbers<[1], [0], [0], [1], [0, 0, 1, 1], [], []>} : vector<8x32xbf16>, vector<32x128xbf16>, vector<8x128xf32> -> vector<8x128xf32>
    %156 = arith.addf %153, %155 : vector<8x128xf32>
    %157 = arith.addf %156, %12 : vector<8x128xf32>
    %158 = arith.negf %157 : vector<8x128xf32>
    %159 = math.exp %158 : vector<8x128xf32>
    %cst_59 = arith.constant 1.000000e+00 : f32
    %160 = vector.broadcast %cst_59 : f32 to vector<8x128xf32>
    %161 = arith.addf %160, %159 : vector<8x128xf32>
    %162 = arith.divf %160, %161 : vector<8x128xf32>
    %163 = vector.extract_strided_slice %162 {offsets = [0, 0], sizes = [8, 32], strides = [1, 1]} : vector<8x128xf32> to vector<8x32xf32>
    %164 = vector.extract_strided_slice %162 {offsets = [0, 32], sizes = [8, 32], strides = [1, 1]} : vector<8x128xf32> to vector<8x32xf32>
    %165 = vector.extract_strided_slice %162 {offsets = [0, 64], sizes = [8, 32], strides = [1, 1]} : vector<8x128xf32> to vector<8x32xf32>
    %cst_60 = arith.constant 2.000000e+00 : f32
    %166 = vector.broadcast %cst_60 : f32 to vector<8x32xf32>
    %167 = arith.mulf %166, %165 : vector<8x32xf32>
    %cst_61 = arith.constant 1.000000e+00 : f32
    %168 = vector.broadcast %cst_61 : f32 to vector<8x32xf32>
    %169 = arith.subf %167, %168 : vector<8x32xf32>
    %170 = vector.extract_strided_slice %162 {offsets = [0, 96], sizes = [8, 32], strides = [1, 1]} : vector<8x128xf32> to vector<8x32xf32>
    %171 = arith.mulf %164, %120 : vector<8x32xf32>
    %172 = arith.mulf %163, %169 : vector<8x32xf32>
    %173 = arith.addf %171, %172 : vector<8x32xf32>
    %174 = math.tanh %173 : vector<8x32xf32>
    %175 = arith.mulf %170, %174 : vector<8x32xf32>
    %176 = arith.index_cast %c2_i32 : i32 to index
    %c0_62 = arith.constant 0 : index
    %c0_63 = arith.constant 0 : index
    %177 = vector.load %arg10[%176, %c0_62, %c0_63] : memref<6x8x32xf32, #tpu.memory_space<vmem>>, vector<1x8x32xf32>
    %178 = vector.shape_cast %177 : vector<1x8x32xf32> to vector<8x32xf32>
    %179 = vector.shape_cast %175 : vector<8x32xf32> to vector<1x8x32xf32>
    tpu.vector_store %arg10[%176, %c0_62, %c0_63], %179 {strides = array<i32>} : memref<6x8x32xf32, #tpu.memory_space<vmem>>, vector<1x8x32xf32>,
    %c3_i32 = arith.constant 3 : i32
    %c8_i32_64 = arith.constant 8 : i32
    %180 = arith.muli %c3_i32, %c8_i32_64 : i32
    %181 = tpu.assume_multiple %180, 8 : i32
    %182 = arith.index_cast %181 : i32 to index
    %c0_65 = arith.constant 0 : index
    %183 = vector.load %arg11[%182, %c0_65] : memref<48x128xf32, #tpu.memory_space<vmem>>, vector<8x128xf32>
    %184 = arith.truncf %151 : vector<8x32xf32> to vector<8x32xbf16>
    %cst_66 = arith.constant dense<0.000000e+00> : vector<8x128xf32>
    %185 = tpu.matmul %184, %0, %cst_66 {dimension_numbers = #tpu.dot_dimension_numbers<[1], [0], [0], [1], [0, 0, 1, 1], [], []>} : vector<8x32xbf16>, vector<32x128xbf16>, vector<8x128xf32> -> vector<8x128xf32>
    %186 = arith.addf %183, %185 : vector<8x128xf32>
    %187 = arith.negf %186 : vector<8x128xf32>
    %188 = math.exp %187 : vector<8x128xf32>
    %cst_67 = arith.constant 1.000000e+00 : f32
    %189 = vector.broadcast %cst_67 : f32 to vector<8x128xf32>
    %190 = arith.addf %189, %188 : vector<8x128xf32>
    %191 = arith.divf %189, %190 : vector<8x128xf32>
    %192 = vector.extract_strided_slice %191 {offsets = [0, 0], sizes = [8, 32], strides = [1, 1]} : vector<8x128xf32> to vector<8x32xf32>
    %193 = vector.extract_strided_slice %191 {offsets = [0, 32], sizes = [8, 32], strides = [1, 1]} : vector<8x128xf32> to vector<8x32xf32>
    %194 = vector.extract_strided_slice %191 {offsets = [0, 64], sizes = [8, 32], strides = [1, 1]} : vector<8x128xf32> to vector<8x32xf32>
    %cst_68 = arith.constant 2.000000e+00 : f32
    %195 = vector.broadcast %cst_68 : f32 to vector<8x32xf32>
    %196 = arith.mulf %195, %194 : vector<8x32xf32>
    %cst_69 = arith.constant 1.000000e+00 : f32
    %197 = vector.broadcast %cst_69 : f32 to vector<8x32xf32>
    %198 = arith.subf %196, %197 : vector<8x32xf32>
    %199 = vector.extract_strided_slice %191 {offsets = [0, 96], sizes = [8, 32], strides = [1, 1]} : vector<8x128xf32> to vector<8x32xf32>
    %200 = arith.mulf %193, %149 : vector<8x32xf32>
    %201 = arith.mulf %192, %198 : vector<8x32xf32>
    %202 = arith.addf %200, %201 : vector<8x32xf32>
    %203 = math.tanh %202 : vector<8x32xf32>
    %204 = arith.mulf %199, %203 : vector<8x32xf32>
    %205 = arith.truncf %204 : vector<8x32xf32> to vector<8x32xbf16>
    %cst_70 = arith.constant dense<0.000000e+00> : vector<8x128xf32>
    %206 = tpu.matmul %205, %1, %cst_70 {dimension_numbers = #tpu.dot_dimension_numbers<[1], [0], [0], [1], [0, 0, 1, 1], [], []>} : vector<8x32xbf16>, vector<32x128xbf16>, vector<8x128xf32> -> vector<8x128xf32>
    %207 = arith.truncf %175 : vector<8x32xf32> to vector<8x32xbf16>
    %cst_71 = arith.constant dense<0.000000e+00> : vector<8x128xf32>
    %208 = tpu.matmul %207, %2, %cst_71 {dimension_numbers = #tpu.dot_dimension_numbers<[1], [0], [0], [1], [0, 0, 1, 1], [], []>} : vector<8x32xbf16>, vector<32x128xbf16>, vector<8x128xf32> -> vector<8x128xf32>
    %209 = arith.addf %206, %208 : vector<8x128xf32>
    %210 = arith.addf %209, %12 : vector<8x128xf32>
    %211 = arith.negf %210 : vector<8x128xf32>
    %212 = math.exp %211 : vector<8x128xf32>
    %cst_72 = arith.constant 1.000000e+00 : f32
    %213 = vector.broadcast %cst_72 : f32 to vector<8x128xf32>
    %214 = arith.addf %213, %212 : vector<8x128xf32>
    %215 = arith.divf %213, %214 : vector<8x128xf32>
    %216 = vector.extract_strided_slice %215 {offsets = [0, 0], sizes = [8, 32], strides = [1, 1]} : vector<8x128xf32> to vector<8x32xf32>
    %217 = vector.extract_strided_slice %215 {offsets = [0, 32], sizes = [8, 32], strides = [1, 1]} : vector<8x128xf32> to vector<8x32xf32>
    %218 = vector.extract_strided_slice %215 {offsets = [0, 64], sizes = [8, 32], strides = [1, 1]} : vector<8x128xf32> to vector<8x32xf32>
    %cst_73 = arith.constant 2.000000e+00 : f32
    %219 = vector.broadcast %cst_73 : f32 to vector<8x32xf32>
    %220 = arith.mulf %219, %218 : vector<8x32xf32>
    %cst_74 = arith.constant 1.000000e+00 : f32
    %221 = vector.broadcast %cst_74 : f32 to vector<8x32xf32>
    %222 = arith.subf %220, %221 : vector<8x32xf32>
    %223 = vector.extract_strided_slice %215 {offsets = [0, 96], sizes = [8, 32], strides = [1, 1]} : vector<8x128xf32> to vector<8x32xf32>
    %224 = arith.mulf %217, %173 : vector<8x32xf32>
    %225 = arith.mulf %216, %222 : vector<8x32xf32>
    %226 = arith.addf %224, %225 : vector<8x32xf32>
    %227 = math.tanh %226 : vector<8x32xf32>
    %228 = arith.mulf %223, %227 : vector<8x32xf32>
    %229 = arith.index_cast %c3_i32 : i32 to index
    %c0_75 = arith.constant 0 : index
    %c0_76 = arith.constant 0 : index
    %230 = vector.load %arg10[%229, %c0_75, %c0_76] : memref<6x8x32xf32, #tpu.memory_space<vmem>>, vector<1x8x32xf32>
    %231 = vector.shape_cast %230 : vector<1x8x32xf32> to vector<8x32xf32>
    %232 = vector.shape_cast %228 : vector<8x32xf32> to vector<1x8x32xf32>
    tpu.vector_store %arg10[%229, %c0_75, %c0_76], %232 {strides = array<i32>} : memref<6x8x32xf32, #tpu.memory_space<vmem>>, vector<1x8x32xf32>,
    %c4_i32 = arith.constant 4 : i32
    %c8_i32_77 = arith.constant 8 : i32
    %233 = arith.muli %c4_i32, %c8_i32_77 : i32
    %234 = tpu.assume_multiple %233, 8 : i32
    %235 = arith.index_cast %234 : i32 to index
    %c0_78 = arith.constant 0 : index
    %236 = vector.load %arg11[%235, %c0_78] : memref<48x128xf32, #tpu.memory_space<vmem>>, vector<8x128xf32>
    %237 = arith.truncf %204 : vector<8x32xf32> to vector<8x32xbf16>
    %cst_79 = arith.constant dense<0.000000e+00> : vector<8x128xf32>
    %238 = tpu.matmul %237, %0, %cst_79 {dimension_numbers = #tpu.dot_dimension_numbers<[1], [0], [0], [1], [0, 0, 1, 1], [], []>} : vector<8x32xbf16>, vector<32x128xbf16>, vector<8x128xf32> -> vector<8x128xf32>
    %239 = arith.addf %236, %238 : vector<8x128xf32>
    %240 = arith.negf %239 : vector<8x128xf32>
    %241 = math.exp %240 : vector<8x128xf32>
    %cst_80 = arith.constant 1.000000e+00 : f32
    %242 = vector.broadcast %cst_80 : f32 to vector<8x128xf32>
    %243 = arith.addf %242, %241 : vector<8x128xf32>
    %244 = arith.divf %242, %243 : vector<8x128xf32>
    %245 = vector.extract_strided_slice %244 {offsets = [0, 0], sizes = [8, 32], strides = [1, 1]} : vector<8x128xf32> to vector<8x32xf32>
    %246 = vector.extract_strided_slice %244 {offsets = [0, 32], sizes = [8, 32], strides = [1, 1]} : vector<8x128xf32> to vector<8x32xf32>
    %247 = vector.extract_strided_slice %244 {offsets = [0, 64], sizes = [8, 32], strides = [1, 1]} : vector<8x128xf32> to vector<8x32xf32>
    %cst_81 = arith.constant 2.000000e+00 : f32
    %248 = vector.broadcast %cst_81 : f32 to vector<8x32xf32>
    %249 = arith.mulf %248, %247 : vector<8x32xf32>
    %cst_82 = arith.constant 1.000000e+00 : f32
    %250 = vector.broadcast %cst_82 : f32 to vector<8x32xf32>
    %251 = arith.subf %249, %250 : vector<8x32xf32>
    %252 = vector.extract_strided_slice %244 {offsets = [0, 96], sizes = [8, 32], strides = [1, 1]} : vector<8x128xf32> to vector<8x32xf32>
    %253 = arith.mulf %246, %202 : vector<8x32xf32>
    %254 = arith.mulf %245, %251 : vector<8x32xf32>
    %255 = arith.addf %253, %254 : vector<8x32xf32>
    %256 = math.tanh %255 : vector<8x32xf32>
    %257 = arith.mulf %252, %256 : vector<8x32xf32>
    %258 = arith.truncf %257 : vector<8x32xf32> to vector<8x32xbf16>
    %cst_83 = arith.constant dense<0.000000e+00> : vector<8x128xf32>
    %259 = tpu.matmul %258, %1, %cst_83 {dimension_numbers = #tpu.dot_dimension_numbers<[1], [0], [0], [1], [0, 0, 1, 1], [], []>} : vector<8x32xbf16>, vector<32x128xbf16>, vector<8x128xf32> -> vector<8x128xf32>
    %260 = arith.truncf %228 : vector<8x32xf32> to vector<8x32xbf16>
    %cst_84 = arith.constant dense<0.000000e+00> : vector<8x128xf32>
    %261 = tpu.matmul %260, %2, %cst_84 {dimension_numbers = #tpu.dot_dimension_numbers<[1], [0], [0], [1], [0, 0, 1, 1], [], []>} : vector<8x32xbf16>, vector<32x128xbf16>, vector<8x128xf32> -> vector<8x128xf32>
    %262 = arith.addf %259, %261 : vector<8x128xf32>
    %263 = arith.addf %262, %12 : vector<8x128xf32>
    %264 = arith.negf %263 : vector<8x128xf32>
    %265 = math.exp %264 : vector<8x128xf32>
    %cst_85 = arith.constant 1.000000e+00 : f32
    %266 = vector.broadcast %cst_85 : f32 to vector<8x128xf32>
    %267 = arith.addf %266, %265 : vector<8x128xf32>
    %268 = arith.divf %266, %267 : vector<8x128xf32>
    %269 = vector.extract_strided_slice %268 {offsets = [0, 0], sizes = [8, 32], strides = [1, 1]} : vector<8x128xf32> to vector<8x32xf32>
    %270 = vector.extract_strided_slice %268 {offsets = [0, 32], sizes = [8, 32], strides = [1, 1]} : vector<8x128xf32> to vector<8x32xf32>
    %271 = vector.extract_strided_slice %268 {offsets = [0, 64], sizes = [8, 32], strides = [1, 1]} : vector<8x128xf32> to vector<8x32xf32>
    %cst_86 = arith.constant 2.000000e+00 : f32
    %272 = vector.broadcast %cst_86 : f32 to vector<8x32xf32>
    %273 = arith.mulf %272, %271 : vector<8x32xf32>
    %cst_87 = arith.constant 1.000000e+00 : f32
    %274 = vector.broadcast %cst_87 : f32 to vector<8x32xf32>
    %275 = arith.subf %273, %274 : vector<8x32xf32>
    %276 = vector.extract_strided_slice %268 {offsets = [0, 96], sizes = [8, 32], strides = [1, 1]} : vector<8x128xf32> to vector<8x32xf32>
    %277 = arith.mulf %270, %226 : vector<8x32xf32>
    %278 = arith.mulf %269, %275 : vector<8x32xf32>
    %279 = arith.addf %277, %278 : vector<8x32xf32>
    %280 = math.tanh %279 : vector<8x32xf32>
    %281 = arith.mulf %276, %280 : vector<8x32xf32>
    %282 = arith.index_cast %c4_i32 : i32 to index
    %c0_88 = arith.constant 0 : index
    %c0_89 = arith.constant 0 : index
    %283 = vector.load %arg10[%282, %c0_88, %c0_89] : memref<6x8x32xf32, #tpu.memory_space<vmem>>, vector<1x8x32xf32>
    %284 = vector.shape_cast %283 : vector<1x8x32xf32> to vector<8x32xf32>
    %285 = vector.shape_cast %281 : vector<8x32xf32> to vector<1x8x32xf32>
    tpu.vector_store %arg10[%282, %c0_88, %c0_89], %285 {strides = array<i32>} : memref<6x8x32xf32, #tpu.memory_space<vmem>>, vector<1x8x32xf32>,
    %c5_i32 = arith.constant 5 : i32
    %c8_i32_90 = arith.constant 8 : i32
    %286 = arith.muli %c5_i32, %c8_i32_90 : i32
    %287 = tpu.assume_multiple %286, 8 : i32
    %288 = arith.index_cast %287 : i32 to index
    %c0_91 = arith.constant 0 : index
    %289 = vector.load %arg11[%288, %c0_91] : memref<48x128xf32, #tpu.memory_space<vmem>>, vector<8x128xf32>
    %290 = arith.truncf %257 : vector<8x32xf32> to vector<8x32xbf16>
    %cst_92 = arith.constant dense<0.000000e+00> : vector<8x128xf32>
    %291 = tpu.matmul %290, %0, %cst_92 {dimension_numbers = #tpu.dot_dimension_numbers<[1], [0], [0], [1], [0, 0, 1, 1], [], []>} : vector<8x32xbf16>, vector<32x128xbf16>, vector<8x128xf32> -> vector<8x128xf32>
    %292 = arith.addf %289, %291 : vector<8x128xf32>
    %293 = arith.negf %292 : vector<8x128xf32>
    %294 = math.exp %293 : vector<8x128xf32>
    %cst_93 = arith.constant 1.000000e+00 : f32
    %295 = vector.broadcast %cst_93 : f32 to vector<8x128xf32>
    %296 = arith.addf %295, %294 : vector<8x128xf32>
    %297 = arith.divf %295, %296 : vector<8x128xf32>
    %298 = vector.extract_strided_slice %297 {offsets = [0, 0], sizes = [8, 32], strides = [1, 1]} : vector<8x128xf32> to vector<8x32xf32>
    %299 = vector.extract_strided_slice %297 {offsets = [0, 32], sizes = [8, 32], strides = [1, 1]} : vector<8x128xf32> to vector<8x32xf32>
    %300 = vector.extract_strided_slice %297 {offsets = [0, 64], sizes = [8, 32], strides = [1, 1]} : vector<8x128xf32> to vector<8x32xf32>
    %cst_94 = arith.constant 2.000000e+00 : f32
    %301 = vector.broadcast %cst_94 : f32 to vector<8x32xf32>
    %302 = arith.mulf %301, %300 : vector<8x32xf32>
    %cst_95 = arith.constant 1.000000e+00 : f32
    %303 = vector.broadcast %cst_95 : f32 to vector<8x32xf32>
    %304 = arith.subf %302, %303 : vector<8x32xf32>
    %305 = vector.extract_strided_slice %297 {offsets = [0, 96], sizes = [8, 32], strides = [1, 1]} : vector<8x128xf32> to vector<8x32xf32>
    %306 = arith.mulf %299, %255 : vector<8x32xf32>
    %307 = arith.mulf %298, %304 : vector<8x32xf32>
    %308 = arith.addf %306, %307 : vector<8x32xf32>
    %309 = math.tanh %308 : vector<8x32xf32>
    %310 = arith.mulf %305, %309 : vector<8x32xf32>
    %311 = arith.truncf %310 : vector<8x32xf32> to vector<8x32xbf16>
    %cst_96 = arith.constant dense<0.000000e+00> : vector<8x128xf32>
    %312 = tpu.matmul %311, %1, %cst_96 {dimension_numbers = #tpu.dot_dimension_numbers<[1], [0], [0], [1], [0, 0, 1, 1], [], []>} : vector<8x32xbf16>, vector<32x128xbf16>, vector<8x128xf32> -> vector<8x128xf32>
    %313 = arith.truncf %281 : vector<8x32xf32> to vector<8x32xbf16>
    %cst_97 = arith.constant dense<0.000000e+00> : vector<8x128xf32>
    %314 = tpu.matmul %313, %2, %cst_97 {dimension_numbers = #tpu.dot_dimension_numbers<[1], [0], [0], [1], [0, 0, 1, 1], [], []>} : vector<8x32xbf16>, vector<32x128xbf16>, vector<8x128xf32> -> vector<8x128xf32>
    %315 = arith.addf %312, %314 : vector<8x128xf32>
    %316 = arith.addf %315, %12 : vector<8x128xf32>
    %317 = arith.negf %316 : vector<8x128xf32>
    %318 = math.exp %317 : vector<8x128xf32>
    %cst_98 = arith.constant 1.000000e+00 : f32
    %319 = vector.broadcast %cst_98 : f32 to vector<8x128xf32>
    %320 = arith.addf %319, %318 : vector<8x128xf32>
    %321 = arith.divf %319, %320 : vector<8x128xf32>
    %322 = vector.extract_strided_slice %321 {offsets = [0, 0], sizes = [8, 32], strides = [1, 1]} : vector<8x128xf32> to vector<8x32xf32>
    %323 = vector.extract_strided_slice %321 {offsets = [0, 32], sizes = [8, 32], strides = [1, 1]} : vector<8x128xf32> to vector<8x32xf32>
    %324 = vector.extract_strided_slice %321 {offsets = [0, 64], sizes = [8, 32], strides = [1, 1]} : vector<8x128xf32> to vector<8x32xf32>
    %cst_99 = arith.constant 2.000000e+00 : f32
    %325 = vector.broadcast %cst_99 : f32 to vector<8x32xf32>
    %326 = arith.mulf %325, %324 : vector<8x32xf32>
    %cst_100 = arith.constant 1.000000e+00 : f32
    %327 = vector.broadcast %cst_100 : f32 to vector<8x32xf32>
    %328 = arith.subf %326, %327 : vector<8x32xf32>
    %329 = vector.extract_strided_slice %321 {offsets = [0, 96], sizes = [8, 32], strides = [1, 1]} : vector<8x128xf32> to vector<8x32xf32>
    %330 = arith.mulf %323, %279 : vector<8x32xf32>
    %331 = arith.mulf %322, %328 : vector<8x32xf32>
    %332 = arith.addf %330, %331 : vector<8x32xf32>
    %333 = math.tanh %332 : vector<8x32xf32>
    %334 = arith.mulf %329, %333 : vector<8x32xf32>
    %335 = arith.index_cast %c5_i32 : i32 to index
    %c0_101 = arith.constant 0 : index
    %c0_102 = arith.constant 0 : index
    %336 = vector.load %arg10[%335, %c0_101, %c0_102] : memref<6x8x32xf32, #tpu.memory_space<vmem>>, vector<1x8x32xf32>
    %337 = vector.shape_cast %336 : vector<1x8x32xf32> to vector<8x32xf32>
    %338 = vector.shape_cast %334 : vector<8x32xf32> to vector<1x8x32xf32>
    tpu.vector_store %arg10[%335, %c0_101, %c0_102], %338 {strides = array<i32>} : memref<6x8x32xf32, #tpu.memory_space<vmem>>, vector<1x8x32xf32>,
    %c6_i32 = arith.constant 6 : i32
    return
  }
  func.func @transform_0(%arg0: i32) -> (i32, i32) {
    %c0_i32 = arith.constant 0 : i32
    %c0_i32_0 = arith.constant 0 : i32
    %c0_i32_1 = arith.constant 0 : i32
    return %c0_i32, %c0_i32_0 : i32, i32
  }
  func.func @transform_1(%arg0: i32) -> (i32, i32, i32) {
    %c0_i32 = arith.constant 0 : i32
    %c0_i32_0 = arith.constant 0 : i32
    %c0_i32_1 = arith.constant 0 : i32
    %c0_i32_2 = arith.constant 0 : i32
    return %c0_i32, %c0_i32_0, %c0_i32_1 : i32, i32, i32
  }
  func.func @transform_2(%arg0: i32) -> (i32, i32, i32) {
    %c0_i32 = arith.constant 0 : i32
    %c0_i32_0 = arith.constant 0 : i32
    %c0_i32_1 = arith.constant 0 : i32
    %c0_i32_2 = arith.constant 0 : i32
    return %c0_i32, %c0_i32_0, %c0_i32_1 : i32, i32, i32
  }
  func.func @transform_3(%arg0: i32) -> (i32, i32) {
    %c0_i32 = arith.constant 0 : i32
    %c0_i32_0 = arith.constant 0 : i32
    %c0_i32_1 = arith.constant 0 : i32
    return %c0_i32, %c0_i32_0 : i32, i32
  }
  func.func @transform_4(%arg0: i32) -> (i32, i32) {
    %c0_i32 = arith.constant 0 : i32
    %c0_i32_0 = arith.constant 0 : i32
    %c0_i32_1 = arith.constant 0 : i32
    return %c0_i32, %c0_i32_0 : i32, i32
  }
  func.func @transform_5(%arg0: i32) -> (i32, i32) {
    %c0_i32 = arith.constant 0 : i32
    %c0_i32_0 = arith.constant 0 : i32
    %c0_i32_1 = arith.constant 0 : i32
    return %c0_i32, %c0_i32_0 : i32, i32
  }
  func.func @transform_6(%arg0: i32) -> (i32, i32) {
    %c0_i32 = arith.constant 0 : i32
    %c0_i32_0 = arith.constant 0 : i32
    %c0_i32_1 = arith.constant 0 : i32
    return %c0_i32, %c0_i32_0 : i32, i32
  }
  func.func @transform_7(%arg0: i32) -> (i32, i32) {
    %c0_i32 = arith.constant 0 : i32
    %c0_i32_0 = arith.constant 0 : i32
    %c0_i32_1 = arith.constant 0 : i32
    return %c0_i32, %c0_i32_0 : i32, i32
  }
  func.func @transform_8(%arg0: i32) -> (i32, i32) {
    %c0_i32 = arith.constant 0 : i32
    %c0_i32_0 = arith.constant 0 : i32
    %c0_i32_1 = arith.constant 0 : i32
    return %c0_i32, %c0_i32_0 : i32, i32
  }
  func.func @transform_9(%arg0: i32) -> (i32, i32, i32) {
    %c0_i32 = arith.constant 0 : i32
    %c0_i32_0 = arith.constant 0 : i32
    %c0_i32_1 = arith.constant 0 : i32
    %c0_i32_2 = arith.constant 0 : i32
    return %c0_i32, %c0_i32_0, %c0_i32_1 : i32, i32, i32
  }
}

</mosaic_0001>

<llo_original>
// kernel: decoder_forward.1
$region0: #{decoder_forward.1}
  #allocation0 [shape = 'u32[]', space=smem, size = 0x4, offset = 0x4, fixed_abs, tag = 'smem constant byte address 0x4 - core index']
  #allocation1 [shape = 'u32[144,128]{1,0:T(1,128)}', space=vmem, size = 0x12000, scoped, tag = 'internal scratch']
  #allocation2 [shape = 'f32[48,128]{1,0:T(8,128)}', space=vmem, size = 0x6000, scoped, tag = 'scratch operand']
  %s0 = inlined_call_operand.vmem [shape: bf16[48,16], index: 0, kind: input, shape index: {}]
  %s1 = inlined_call_operand.vmem [shape: f32[2,8,32], index: 1, kind: input, shape index: {}]
  %s2 = inlined_call_operand.vmem [shape: f32[2,8,32], index: 2, kind: input, shape index: {}]
  %s3 = inlined_call_operand.vmem [shape: bf16[16,128], index: 3, kind: input, shape index: {}]
  %s4 = inlined_call_operand.vmem [shape: f32[1,128], index: 4, kind: input, shape index: {}]
  %s5 = inlined_call_operand.vmem [shape: bf16[32,128], index: 5, kind: input, shape index: {}]
  %s6 = inlined_call_operand.vmem [shape: bf16[32,128], index: 6, kind: input, shape index: {}]
  %s7 = inlined_call_operand.vmem [shape: bf16[32,128], index: 7, kind: input, shape index: {}]
  %s8 = inlined_call_operand.vmem [shape: f32[1,128], index: 8, kind: input, shape index: {}]
  %s9 = inlined_call_operand.hbm [shape: f32[6,8,32], index: 9, kind: output, shape index: {}]
  %s10 = sld [smem:[#allocation0]]
  $region46: #{decoder_forward.1} parent=0
    _
  %s12 = ssub.s32 1, %s10
  %s13 = scalar_select 0, %s12, %s10
  $region1: #{decoder_forward.1} parent=0
    #allocation3 [shape = 'u8[24576]{0}', space=vmem, size = 0x6000, scoped, tag = 'output window, operand 0, single buffered']
    #allocation4 [shape = 's32[1]{0}', space=sflag, size = 0x4, scoped, tag = 'scoped memory for decoder_forward.1']
    %14 = vsyncpa [#allocation4], 0
    // Predicated region
    $region2: #{decoder_forward.1} parent=1 // pred_check
      _
    $region3: #{decoder_forward.1} parent=1 // pred_check_branch
      %16 = sbr.rel (0) target = $region5
    $region4: #{decoder_forward.1} parent=1 // pred_region
      _
    $region5: #{decoder_forward.1} parent=1 // pred_fallthru
      _
    // Predicated region
    $region6: #{decoder_forward.1} parent=1 // pred_check
      _
    $region7: #{decoder_forward.1} parent=1 // pred_check_branch
      %18 = sbr.rel (0) target = $region9
    $region8: #{decoder_forward.1} parent=1 // pred_region
      _
    $region9: #{decoder_forward.1} parent=1 // pred_fallthru
      _
    // Predicated region
    $region10: #{decoder_forward.1} parent=1 // pred_check
      _
    $region11: #{decoder_forward.1} parent=1 // pred_check_branch
      %20 = sbr.rel (0) target = $region13
    $region12: #{decoder_forward.1} parent=1 // pred_region
      _
    $region13: #{decoder_forward.1} parent=1 // pred_fallthru
      _
    // Predicated region
    $region14: #{decoder_forward.1} parent=1 // pred_check
      _
    $region15: #{decoder_forward.1} parent=1 // pred_check_branch
      %22 = sbr.rel (0) target = $region17
    $region16: #{decoder_forward.1} parent=1 // pred_region
      _
    $region17: #{decoder_forward.1} parent=1 // pred_fallthru
      _
    // Predicated region
    $region18: #{decoder_forward.1} parent=1 // pred_check
      _
    $region19: #{decoder_forward.1} parent=1 // pred_check_branch
      %24 = sbr.rel (0) target = $region21
    $region20: #{decoder_forward.1} parent=1 // pred_region
      _
    $region21: #{decoder_forward.1} parent=1 // pred_fallthru
      _
    // Predicated region
    $region22: #{decoder_forward.1} parent=1 // pred_check
      _
    $region23: #{decoder_forward.1} parent=1 // pred_check_branch
      %26 = sbr.rel (0) target = $region25
    $region24: #{decoder_forward.1} parent=1 // pred_region
      _
    $region25: #{decoder_forward.1} parent=1 // pred_fallthru
      _
    // Predicated region
    $region26: #{decoder_forward.1} parent=1 // pred_check
      _
    $region27: #{decoder_forward.1} parent=1 // pred_check_branch
      %28 = sbr.rel (0) target = $region29
    $region28: #{decoder_forward.1} parent=1 // pred_region
      _
    $region29: #{decoder_forward.1} parent=1 // pred_fallthru
      _
    // Predicated region
    $region30: #{decoder_forward.1} parent=1 // pred_check
      _
    $region31: #{decoder_forward.1} parent=1 // pred_check_branch
      %30 = sbr.rel (0) target = $region33
    $region32: #{decoder_forward.1} parent=1 // pred_region
      _
    $region33: #{decoder_forward.1} parent=1 // pred_fallthru
      _
    // Predicated region
    $region34: #{decoder_forward.1} parent=1 // pred_check
      _
    $region35: #{decoder_forward.1} parent=1 // pred_check_branch
      %32 = sbr.rel (0) target = $region37
    $region36: #{decoder_forward.1} parent=1 // pred_region
      _
    $region37: #{decoder_forward.1} parent=1 // pred_fallthru
      _
    %v34 = vld [vmem:[%s5] sm:$0xf]
    %v35 = vld [vmem:[%s5 + $0x4] sm:$0xf]
    %v36 = vld [vmem:[%s5 + $0x8] sm:$0xf]
    %v37 = vld [vmem:[%s5 + $0xc] sm:$0xf]
    %v38 = vld [vmem:[%s6] sm:$0xf]
    %v39 = vld [vmem:[%s6 + $0x4] sm:$0xf]
    %v40 = vld [vmem:[%s6 + $0x8] sm:$0xf]
    %v41 = vld [vmem:[%s6 + $0xc] sm:$0xf]
    %v42 = vld [vmem:[%s7] sm:$0xf]
    %v43 = vld [vmem:[%s7 + $0x4] sm:$0xf]
    %v44 = vld [vmem:[%s7 + $0x8] sm:$0xf]
    %v45 = vld [vmem:[%s7 + $0xc] sm:$0xf]
    %v46 = vld [vmem:[%s0] sm:$0xf]
    %v47 = vld [vmem:[%s0 + $0x4] sm:$0xf]
    %v48 = vld [vmem:[%s0 + $0x8] sm:$0xf]
    %v49 = vld [vmem:[%s0 + $0xc] sm:$0xf]
    %v50 = vld [vmem:[%s0 + $0x10] sm:$0xf]
    %v51 = vld [vmem:[%s0 + $0x14] sm:$0xf]
    %v52 = vld [vmem:[%s3] sm:$0xf]
    %v53 = vld [vmem:[%s3 + $0x4] sm:$0xf]
    %v54 = vld [vmem:[%s4] sm:$0x1]
    %v56 = vlaneseq
    %v57 = vshrl.u32 %v56, 7
    %v58 = vsub.s32 0, %v57
    %v59 = vrot.slane %v54, %v58
    %v67 = vunpack.c.l.b16 %v46
    %v68 = vunpack.c.l.b16 %v47
    %v69 = vunpack.c.l.b16 %v48
    %v70 = vunpack.c.l.b16 %v49
    %v71 = vunpack.c.l.b16 %v50
    %v72 = vunpack.c.l.b16 %v51
    %v73 = vpack.c.b16 %v68, %v67
    %v74 = vpack.c.b16 %v70, %v69
    %v75 = vpack.c.b16 %v72, %v71
    %v78 = vunpack.c.l.b16 %v52
    %v79 = vunpack.c.l.b16 %v53
    %v80 = vpack.c.b16 %v79, %v78
    %vm82 = vcmask 130048
    %v84 = vsel %vm82, %v73, 0
    %v87 = vsel %vm82, %v74, 0
    %v90 = vsel %vm82, %v75, 0
    %92 = vmatprep.subr.bf16.mxu0 0
    %93 = vmatpush1.bf16.msra.mxu0 %v80
    %94 = vmatprep.subr.bf16.mxu0 0
    %95 = vmatpush1.bf16.msra.mxu0 0
    %96 = vmatprep.subr.bf16.mxu0 0
    %97 = vmatpush1.bf16.msra.mxu0 0
    %98 = vmatprep.subr.bf16.mxu0 0
    %99 = vmatpush1.bf16.msra.mxu0 0
    %100 = vmatprep.subr.bf16.mxu0 0
    %101 = vmatpush1.bf16.msra.mxu0 0
    %102 = vmatprep.subr.bf16.mxu0 0
    %103 = vmatpush1.bf16.msra.mxu0 0
    %104 = vmatprep.subr.bf16.mxu0 0
    %105 = vmatpush1.bf16.msra.mxu0 0
    %106 = vmatprep.subr.bf16.mxu0 0
    %107 = vmatpush1.bf16.msra.mxu0 0
    %108 = vmatprep.subr.bf16.mxu0 0
    %109 = vmatpush1.bf16.msra.mxu0 0
    %110 = vmatprep.subr.bf16.mxu0 0
    %111 = vmatpush1.bf16.msra.mxu0 0
    %112 = vmatprep.subr.bf16.mxu0 0
    %113 = vmatpush1.bf16.msra.mxu0 0
    %114 = vmatprep.subr.bf16.mxu0 0
    %115 = vmatpush1.bf16.msra.mxu0 0
    %116 = vmatprep.subr.bf16.mxu0 0
    %117 = vmatpush1.bf16.msra.mxu0 0
    %118 = vmatprep.subr.bf16.mxu0 0
    %119 = vmatpush1.bf16.msra.mxu0 0
    %120 = vmatprep.subr.bf16.mxu0 0
    %121 = vmatpush1.bf16.msra.mxu0 0
    %122 = vmatprep.subr.bf16.mxu0 0
    %123 = vmatpush1.bf16.msra.mxu0 0
    %124 = vmatprep.mubr.bf16.mxu0 0
    %125 = vmatmul.mubr.bf16.gmra.mrb[0].mxu0 %v84
    %v126 = vpop.f32.mrb[0].mxu0
    %v127 = vadd.f32 %v59, %v126
    %v128 = vpop.f32.mrb[0].mxu0
    %v129 = vpop.f32.mrb[0].mxu0
    %v130 = vadd.f32 %v59, %v129
    %v131 = vpop.f32.mrb[0].mxu0
    %132 = vmatprep.mubr.bf16.mxu0 0
    %133 = vmatmul.mubr.bf16.gmra.mrb[0].mxu0 %v87
    %v134 = vpop.f32.mrb[0].mxu0
    %v135 = vadd.f32 %v59, %v134
    %v136 = vpop.f32.mrb[0].mxu0
    %v137 = vpop.f32.mrb[0].mxu0
    %v138 = vadd.f32 %v59, %v137
    %v139 = vpop.f32.mrb[0].mxu0
    %140 = vmatprep.mubr.bf16.mxu0 0
    %141 = vmatmul.mubr.bf16.gmra.mrb[0].mxu0 %v90
    %v142 = vpop.f32.mrb[0].mxu0
    %v143 = vadd.f32 %v59, %v142
    %v144 = vpop.f32.mrb[0].mxu0
    %v145 = vpop.f32.mrb[0].mxu0
    %v146 = vadd.f32 %v59, %v145
    %v147 = vpop.f32.mrb[0].mxu0
    %148 = vdwg.mxu0
    %149 = vst [vmem:[#allocation2] sm:$0xff] %v127
    %150 = vst [vmem:[#allocation2 + $0x8] sm:$0xff] %v130
    %151 = vst [vmem:[#allocation2 + $0x10] sm:$0xff] %v135
    %152 = vst [vmem:[#allocation2 + $0x18] sm:$0xff] %v138
    %153 = vst [vmem:[#allocation2 + $0x20] sm:$0xff] %v143
    %154 = vst [vmem:[#allocation2 + $0x28] sm:$0xff] %v146
    %v155 = vld [vmem:[%s8] sm:$0x1]
    %v157 = vlaneseq
    %v158 = vshrl.u32 %v157, 7
    %v159 = vsub.s32 0, %v158
    %v160 = vrot.slane %v155, %v159
    %v162 = vld [vmem:[%s1] sm:$0xff]
    %v163 = vld [vmem:[%s2] sm:$0xff]
    %s164 = scalar_lea.vmem %s1, 8
    %v165 = vld [vmem:[%s164] sm:$0xff]
    %s166 = scalar_lea.vmem %s2, 8
    %v167 = vld [vmem:[%s166] sm:$0xff]
    %v168 = vld [vmem:[#allocation2] sm:$0xff]
    %v169 = vpack.c.bf16 %v162, %v162
    %v174 = vunpack.c.l.b16 %v34
    %v175 = vunpack.c.l.b16 %v35
    %v176 = vunpack.c.l.b16 %v36
    %v177 = vunpack.c.l.b16 %v37
    %v178 = vpack.c.b16 %v175, %v174
    %v179 = vpack.c.b16 %v177, %v176
    %vm182 = vcmask 261120
    %v184 = vsel %vm182, %v169, 0
    %186 = vmatprep.subr.bf16.mxu0 0
    %187 = vmatpush1.bf16.msra.mxu0 %v178
    %188 = vmatprep.subr.bf16.mxu0 0
    %189 = vmatpush1.bf16.msra.mxu0 %v179
    %190 = vmatprep.subr.bf16.mxu0 0
    %191 = vmatpush1.bf16.msra.mxu0 0
    %192 = vmatprep.subr.bf16.mxu0 0
    %193 = vmatpush1.bf16.msra.mxu0 0
    %194 = vmatprep.subr.bf16.mxu0 0
    %195 = vmatpush1.bf16.msra.mxu0 0
    %196 = vmatprep.subr.bf16.mxu0 0
    %197 = vmatpush1.bf16.msra.mxu0 0
    %198 = vmatprep.subr.bf16.mxu0 0
    %199 = vmatpush1.bf16.msra.mxu0 0
    %200 = vmatprep.subr.bf16.mxu0 0
    %201 = vmatpush1.bf16.msra.mxu0 0
    %202 = vmatprep.subr.bf16.mxu0 0
    %203 = vmatpush1.bf16.msra.mxu0 0
    %204 = vmatprep.subr.bf16.mxu0 0
    %205 = vmatpush1.bf16.msra.mxu0 0
    %206 = vmatprep.subr.bf16.mxu0 0
    %207 = vmatpush1.bf16.msra.mxu0 0
    %208 = vmatprep.subr.bf16.mxu0 0
    %209 = vmatpush1.bf16.msra.mxu0 0
    %210 = vmatprep.subr.bf16.mxu0 0
    %211 = vmatpush1.bf16.msra.mxu0 0
    %212 = vmatprep.subr.bf16.mxu0 0
    %213 = vmatpush1.bf16.msra.mxu0 0
    %214 = vmatprep.subr.bf16.mxu0 0
    %215 = vmatpush1.bf16.msra.mxu0 0
    %216 = vmatprep.subr.bf16.mxu0 0
    %217 = vmatpush1.bf16.msra.mxu0 0
    %218 = vmatprep.mubr.bf16.mxu0 0
    %219 = vmatmul.mubr.bf16.gmra.mrb[0].mxu0 %v184
    %v220 = vpop.f32.mrb[0].mxu0
    %v221 = vadd.f32 0.0, %v220
    %v222 = vpop.f32.mrb[0].mxu0
    %v223 = vpop.f32.mrb[0].mxu0
    %v224 = vpop.f32.mrb[0].mxu0
    %225 = vdwg.mxu0
    %v226 = vadd.f32 %v168, %v221
    %v227 = vxor.u32 %v226, 2147483648
    %v228 = vmul.f32 %v227, 1.442695
    %v229 = vpow.pop %v228
    %v230 = vadd.f32 %v229, 1.0
    %v231 = vrcp.pop %v230
    %v232 = vmul.f32 1.0, %v231
    %v233 = vmul.f32 %v232, 2.0
    %v234 = vsub.f32 %v233, 1.0
    %236 = vrot.lane.b32.xlu0 %v163, 32
    %v237 = vpop.permute.xlu0 %236
    %v239 = vmul.f32 %v232, %v237
    %241 = vrot.lane.b32.xlu0 %v234, 64
    %v242 = vpop.permute.xlu0 %241
    %v244 = vmul.f32 %v232, %v242
    %246 = vrot.lane.b32.xlu0 %v244, 32
    %v247 = vpop.permute.xlu0 %246
    %v249 = vadd.f32 %v239, %v247
    %v250 = vtanh.pop %v249
    %252 = vrot.lane.b32.xlu0 %v250, 64
    %v253 = vpop.permute.xlu0 %252
    %v255 = vmul.f32 %v232, %v253
    %v256 = vpack.c.bf16 %v255, %v255
    %v257 = vpack.c.bf16 %v165, %v165
    %v262 = vunpack.c.l.b16 %v42
    %v263 = vunpack.c.l.b16 %v43
    %v264 = vunpack.c.l.b16 %v44
    %v265 = vunpack.c.l.b16 %v45
    %v266 = vpack.c.b16 %v263, %v262
    %v267 = vpack.c.b16 %v265, %v264
    %v271 = vsel %vm182, %v257, 0
    %273 = vmatprep.subr.bf16.mxu0 0
    %274 = vmatpush1.bf16.msra.mxu0 %v266
    %275 = vmatprep.subr.bf16.mxu0 0
    %276 = vmatpush1.bf16.msra.mxu0 %v267
    %277 = vmatprep.subr.bf16.mxu0 0
    %278 = vmatpush1.bf16.msra.mxu0 0
    %279 = vmatprep.subr.bf16.mxu0 0
    %280 = vmatpush1.bf16.msra.mxu0 0
    %281 = vmatprep.subr.bf16.mxu0 0
    %282 = vmatpush1.bf16.msra.mxu0 0
    %283 = vmatprep.subr.bf16.mxu0 0
    %284 = vmatpush1.bf16.msra.mxu0 0
    %285 = vmatprep.subr.bf16.mxu0 0
    %286 = vmatpush1.bf16.msra.mxu0 0
    %287 = vmatprep.subr.bf16.mxu0 0
    %288 = vmatpush1.bf16.msra.mxu0 0
    %289 = vmatprep.subr.bf16.mxu0 0
    %290 = vmatpush1.bf16.msra.mxu0 0
    %291 = vmatprep.subr.bf16.mxu0 0
    %292 = vmatpush1.bf16.msra.mxu0 0
    %293 = vmatprep.subr.bf16.mxu0 0
    %294 = vmatpush1.bf16.msra.mxu0 0
    %295 = vmatprep.subr.bf16.mxu0 0
    %296 = vmatpush1.bf16.msra.mxu0 0
    %297 = vmatprep.subr.bf16.mxu0 0
    %298 = vmatpush1.bf16.msra.mxu0 0
    %299 = vmatprep.subr.bf16.mxu0 0
    %300 = vmatpush1.bf16.msra.mxu0 0
    %301 = vmatprep.subr.bf16.mxu0 0
    %302 = vmatpush1.bf16.msra.mxu0 0
    %303 = vmatprep.subr.bf16.mxu0 0
    %304 = vmatpush1.bf16.msra.mxu0 0
    %305 = vmatprep.mubr.bf16.mxu0 0
    %306 = vmatmul.mubr.bf16.gmra.mrb[0].mxu0 %v271
    %v307 = vpop.f32.mrb[0].mxu0
    %v308 = vadd.f32 0.0, %v307
    %v309 = vpop.f32.mrb[0].mxu0
    %v310 = vpop.f32.mrb[0].mxu0
    %v311 = vpop.f32.mrb[0].mxu0
    %312 = vdwg.mxu0
    %314 = vrot.lane.b32.xlu0 %v256, 32
    %v315 = vpop.permute.xlu0 %314
    %v320 = vunpack.c.l.b16 %v38
    %v321 = vunpack.c.l.b16 %v39
    %v322 = vunpack.c.l.b16 %v40
    %v323 = vunpack.c.l.b16 %v41
    %v324 = vpack.c.b16 %v321, %v320
    %v325 = vpack.c.b16 %v323, %v322
    %v329 = vsel %vm182, %v315, 0
    %331 = vmatprep.subr.bf16.mxu0 0
    %332 = vmatpush1.bf16.msra.mxu0 %v324
    %333 = vmatprep.subr.bf16.mxu0 0
    %334 = vmatpush1.bf16.msra.mxu0 %v325
    %335 = vmatprep.subr.bf16.mxu0 0
    %336 = vmatpush1.bf16.msra.mxu0 0
    %337 = vmatprep.subr.bf16.mxu0 0
    %338 = vmatpush1.bf16.msra.mxu0 0
    %339 = vmatprep.subr.bf16.mxu0 0
    %340 = vmatpush1.bf16.msra.mxu0 0
    %341 = vmatprep.subr.bf16.mxu0 0
    %342 = vmatpush1.bf16.msra.mxu0 0
    %343 = vmatprep.subr.bf16.mxu0 0
    %344 = vmatpush1.bf16.msra.mxu0 0
    %345 = vmatprep.subr.bf16.mxu0 0
    %346 = vmatpush1.bf16.msra.mxu0 0
    %347 = vmatprep.subr.bf16.mxu0 0
    %348 = vmatpush1.bf16.msra.mxu0 0
    %349 = vmatprep.subr.bf16.mxu0 0
    %350 = vmatpush1.bf16.msra.mxu0 0
    %351 = vmatprep.subr.bf16.mxu0 0
    %352 = vmatpush1.bf16.msra.mxu0 0
    %353 = vmatprep.subr.bf16.mxu0 0
    %354 = vmatpush1.bf16.msra.mxu0 0
    %355 = vmatprep.subr.bf16.mxu0 0
    %356 = vmatpush1.bf16.msra.mxu0 0
    %357 = vmatprep.subr.bf16.mxu0 0
    %358 = vmatpush1.bf16.msra.mxu0 0
    %359 = vmatprep.subr.bf16.mxu0 0
    %360 = vmatpush1.bf16.msra.mxu0 0
    %361 = vmatprep.subr.bf16.mxu0 0
    %362 = vmatpush1.bf16.msra.mxu0 0
    %363 = vmatprep.mubr.bf16.mxu0 0
    %364 = vmatmul.mubr.bf16.gmra.mrb[0].mxu0 %v329
    %v365 = vpop.f32.mrb[0].mxu0
    %v366 = vadd.f32 %v308, %v365
    %v367 = vpop.f32.mrb[0].mxu0
    %v368 = vpop.f32.mrb[0].mxu0
    %v369 = vpop.f32.mrb[0].mxu0
    %370 = vdwg.mxu0
    %v371 = vadd.f32 %v366, %v160
    %v372 = vxor.u32 %v371, 2147483648
    %v373 = vmul.f32 %v372, 1.442695
    %v374 = vpow.pop %v373
    %v375 = vadd.f32 %v374, 1.0
    %v376 = vrcp.pop %v375
    %v377 = vmul.f32 1.0, %v376
    %v378 = vmul.f32 %v377, 2.0
    %v379 = vsub.f32 %v378, 1.0
    %381 = vrot.lane.b32.xlu0 %v167, 32
    %v382 = vpop.permute.xlu0 %381
    %v384 = vmul.f32 %v377, %v382
    %386 = vrot.lane.b32.xlu0 %v379, 64
    %v387 = vpop.permute.xlu0 %386
    %v389 = vmul.f32 %v377, %v387
    %391 = vrot.lane.b32.xlu0 %v389, 32
    %v392 = vpop.permute.xlu0 %391
    %v394 = vadd.f32 %v384, %v392
    %v395 = vtanh.pop %v394
    %397 = vrot.lane.b32.xlu0 %v395, 64
    %v398 = vpop.permute.xlu0 %397
    %v400 = vmul.f32 %v377, %v398
    %402 = vrot.lane.b32.xlu0 %v400, 32
    %v403 = vpop.permute.xlu0 %402
    %405 = vst.msk [vmem:[#allocation3] sm:$0xff] %vm182, %v403
    %s406 = scalar_lea.vmem [#allocation2], 8
    %v407 = vld [vmem:[%s406] sm:$0xff]
    %408 = vmatprep.subr.bf16.mxu0 0
    %409 = vmatpush1.bf16.msra.mxu0 %v178
    %410 = vmatprep.subr.bf16.mxu0 0
    %411 = vmatpush1.bf16.msra.mxu0 %v179
    %412 = vmatprep.subr.bf16.mxu0 0
    %413 = vmatpush1.bf16.msra.mxu0 0
    %414 = vmatprep.subr.bf16.mxu0 0
    %415 = vmatpush1.bf16.msra.mxu0 0
    %416 = vmatprep.subr.bf16.mxu0 0
    %417 = vmatpush1.bf16.msra.mxu0 0
    %418 = vmatprep.subr.bf16.mxu0 0
    %419 = vmatpush1.bf16.msra.mxu0 0
    %420 = vmatprep.subr.bf16.mxu0 0
    %421 = vmatpush1.bf16.msra.mxu0 0
    %422 = vmatprep.subr.bf16.mxu0 0
    %423 = vmatpush1.bf16.msra.mxu0 0
    %424 = vmatprep.subr.bf16.mxu0 0
    %425 = vmatpush1.bf16.msra.mxu0 0
    %426 = vmatprep.subr.bf16.mxu0 0
    %427 = vmatpush1.bf16.msra.mxu0 0
    %428 = vmatprep.subr.bf16.mxu0 0
    %429 = vmatpush1.bf16.msra.mxu0 0
    %430 = vmatprep.subr.bf16.mxu0 0
    %431 = vmatpush1.bf16.msra.mxu0 0
    %432 = vmatprep.subr.bf16.mxu0 0
    %433 = vmatpush1.bf16.msra.mxu0 0
    %434 = vmatprep.subr.bf16.mxu0 0
    %435 = vmatpush1.bf16.msra.mxu0 0
    %436 = vmatprep.subr.bf16.mxu0 0
    %437 = vmatpush1.bf16.msra.mxu0 0
    %438 = vmatprep.subr.bf16.mxu0 0
    %439 = vmatpush1.bf16.msra.mxu0 0
    %440 = vmatprep.mubr.bf16.mxu0 0
    %441 = vmatmul.mubr.bf16.gmra.mrb[0].mxu0 %v329
    %v442 = vpop.f32.mrb[0].mxu0
    %v443 = vadd.f32 0.0, %v442
    %v444 = vpop.f32.mrb[0].mxu0
    %v445 = vpop.f32.mrb[0].mxu0
    %v446 = vpop.f32.mrb[0].mxu0
    %447 = vdwg.mxu0
    %v448 = vadd.f32 %v407, %v443
    %v449 = vxor.u32 %v448, 2147483648
    %v450 = vmul.f32 %v449, 1.442695
    %v451 = vpow.pop %v450
    %v452 = vadd.f32 %v451, 1.0
    %v453 = vrcp.pop %v452
    %v454 = vmul.f32 1.0, %v453
    %v455 = vmul.f32 %v454, 2.0
    %v456 = vsub.f32 %v455, 1.0
    %v457 = vmul.f32 %v454, %v249
    %459 = vrot.lane.b32.xlu0 %v456, 64
    %v460 = vpop.permute.xlu0 %459
    %v462 = vmul.f32 %v454, %v460
    %464 = vrot.lane.b32.xlu0 %v462, 32
    %v465 = vpop.permute.xlu0 %464
    %v467 = vadd.f32 %v457, %v465
    %v468 = vtanh.pop %v467
    %470 = vrot.lane.b32.xlu0 %v468, 64
    %v471 = vpop.permute.xlu0 %470
    %v473 = vmul.f32 %v454, %v471
    %v474 = vpack.c.bf16 %v473, %v473
    %v475 = vpack.c.bf16 %v400, %v400
    %477 = vrot.lane.b32.xlu0 %v475, 32
    %v478 = vpop.permute.xlu0 %477
    %v480 = vsel %vm182, %v478, 0
    %482 = vmatprep.subr.bf16.mxu0 0
    %483 = vmatpush1.bf16.msra.mxu0 %v266
    %484 = vmatprep.subr.bf16.mxu0 0
    %485 = vmatpush1.bf16.msra.mxu0 %v267
    %486 = vmatprep.subr.bf16.mxu0 0
    %487 = vmatpush1.bf16.msra.mxu0 0
    %488 = vmatprep.subr.bf16.mxu0 0
    %489 = vmatpush1.bf16.msra.mxu0 0
    %490 = vmatprep.subr.bf16.mxu0 0
    %491 = vmatpush1.bf16.msra.mxu0 0
    %492 = vmatprep.subr.bf16.mxu0 0
    %493 = vmatpush1.bf16.msra.mxu0 0
    %494 = vmatprep.subr.bf16.mxu0 0
    %495 = vmatpush1.bf16.msra.mxu0 0
    %496 = vmatprep.subr.bf16.mxu0 0
    %497 = vmatpush1.bf16.msra.mxu0 0
    %498 = vmatprep.subr.bf16.mxu0 0
    %499 = vmatpush1.bf16.msra.mxu0 0
    %500 = vmatprep.subr.bf16.mxu0 0
    %501 = vmatpush1.bf16.msra.mxu0 0
    %502 = vmatprep.subr.bf16.mxu0 0
    %503 = vmatpush1.bf16.msra.mxu0 0
    %504 = vmatprep.subr.bf16.mxu0 0
    %505 = vmatpush1.bf16.msra.mxu0 0
    %506 = vmatprep.subr.bf16.mxu0 0
    %507 = vmatpush1.bf16.msra.mxu0 0
    %508 = vmatprep.subr.bf16.mxu0 0
    %509 = vmatpush1.bf16.msra.mxu0 0
    %510 = vmatprep.subr.bf16.mxu0 0
    %511 = vmatpush1.bf16.msra.mxu0 0
    %512 = vmatprep.subr.bf16.mxu0 0
    %513 = vmatpush1.bf16.msra.mxu0 0
    %514 = vmatprep.mubr.bf16.mxu0 0
    %515 = vmatmul.mubr.bf16.gmra.mrb[0].mxu0 %v480
    %v516 = vpop.f32.mrb[0].mxu0
    %v517 = vadd.f32 0.0, %v516
    %v518 = vpop.f32.mrb[0].mxu0
    %v519 = vpop.f32.mrb[0].mxu0
    %v520 = vpop.f32.mrb[0].mxu0
    %521 = vdwg.mxu0
    %523 = vrot.lane.b32.xlu0 %v474, 32
    %v524 = vpop.permute.xlu0 %523
    %v526 = vsel %vm182, %v524, 0
    %528 = vmatprep.subr.bf16.mxu0 0
    %529 = vmatpush1.bf16.msra.mxu0 %v324
    %530 = vmatprep.subr.bf16.mxu0 0
    %531 = vmatpush1.bf16.msra.mxu0 %v325
    %532 = vmatprep.subr.bf16.mxu0 0
    %533 = vmatpush1.bf16.msra.mxu0 0
    %534 = vmatprep.subr.bf16.mxu0 0
    %535 = vmatpush1.bf16.msra.mxu0 0
    %536 = vmatprep.subr.bf16.mxu0 0
    %537 = vmatpush1.bf16.msra.mxu0 0
    %538 = vmatprep.subr.bf16.mxu0 0
    %539 = vmatpush1.bf16.msra.mxu0 0
    %540 = vmatprep.subr.bf16.mxu0 0
    %541 = vmatpush1.bf16.msra.mxu0 0
    %542 = vmatprep.subr.bf16.mxu0 0
    %543 = vmatpush1.bf16.msra.mxu0 0
    %544 = vmatprep.subr.bf16.mxu0 0
    %545 = vmatpush1.bf16.msra.mxu0 0
    %546 = vmatprep.subr.bf16.mxu0 0
    %547 = vmatpush1.bf16.msra.mxu0 0
    %548 = vmatprep.subr.bf16.mxu0 0
    %549 = vmatpush1.bf16.msra.mxu0 0
    %550 = vmatprep.subr.bf16.mxu0 0
    %551 = vmatpush1.bf16.msra.mxu0 0
    %552 = vmatprep.subr.bf16.mxu0 0
    %553 = vmatpush1.bf16.msra.mxu0 0
    %554 = vmatprep.subr.bf16.mxu0 0
    %555 = vmatpush1.bf16.msra.mxu0 0
    %556 = vmatprep.subr.bf16.mxu0 0
    %557 = vmatpush1.bf16.msra.mxu0 0
    %558 = vmatprep.subr.bf16.mxu0 0
    %559 = vmatpush1.bf16.msra.mxu0 0
    %560 = vmatprep.mubr.bf16.mxu0 0
    %561 = vmatmul.mubr.bf16.gmra.mrb[0].mxu0 %v526
    %v562 = vpop.f32.mrb[0].mxu0
    %v563 = vadd.f32 %v517, %v562
    %v564 = vpop.f32.mrb[0].mxu0
    %v565 = vpop.f32.mrb[0].mxu0
    %v566 = vpop.f32.mrb[0].mxu0
    %567 = vdwg.mxu0
    %v568 = vadd.f32 %v563, %v160
    %v569 = vxor.u32 %v568, 2147483648
    %v570 = vmul.f32 %v569, 1.442695
    %v571 = vpow.pop %v570
    %v572 = vadd.f32 %v571, 1.0
    %v573 = vrcp.pop %v572
    %v574 = vmul.f32 1.0, %v573
    %v575 = vmul.f32 %v574, 2.0
    %v576 = vsub.f32 %v575, 1.0
    %v577 = vmul.f32 %v574, %v394
    %579 = vrot.lane.b32.xlu0 %v576, 64
    %v580 = vpop.permute.xlu0 %579
    %v582 = vmul.f32 %v574, %v580
    %584 = vrot.lane.b32.xlu0 %v582, 32
    %v585 = vpop.permute.xlu0 %584
    %v587 = vadd.f32 %v577, %v585
    %v588 = vtanh.pop %v587
    %590 = vrot.lane.b32.xlu0 %v588, 64
    %v591 = vpop.permute.xlu0 %590
    %v593 = vmul.f32 %v574, %v591
    %595 = vrot.lane.b32.xlu0 %v593, 32
    %v596 = vpop.permute.xlu0 %595
    %s598 = scalar_lea.vmem [#allocation3], 8
    %599 = vst.msk [vmem:[%s598] sm:$0xff] %vm182, %v596
    %s600 = scalar_lea.vmem [#allocation2], 16
    %v601 = vld [vmem:[%s600] sm:$0xff]
    %602 = vmatprep.subr.bf16.mxu0 0
    %603 = vmatpush1.bf16.msra.mxu0 %v178
    %604 = vmatprep.subr.bf16.mxu0 0
    %605 = vmatpush1.bf16.msra.mxu0 %v179
    %606 = vmatprep.subr.bf16.mxu0 0
    %607 = vmatpush1.bf16.msra.mxu0 0
    %608 = vmatprep.subr.bf16.mxu0 0
    %609 = vmatpush1.bf16.msra.mxu0 0
    %610 = vmatprep.subr.bf16.mxu0 0
    %611 = vmatpush1.bf16.msra.mxu0 0
    %612 = vmatprep.subr.bf16.mxu0 0
    %613 = vmatpush1.bf16.msra.mxu0 0
    %614 = vmatprep.subr.bf16.mxu0 0
    %615 = vmatpush1.bf16.msra.mxu0 0
    %616 = vmatprep.subr.bf16.mxu0 0
    %617 = vmatpush1.bf16.msra.mxu0 0
    %618 = vmatprep.subr.bf16.mxu0 0
    %619 = vmatpush1.bf16.msra.mxu0 0
    %620 = vmatprep.subr.bf16.mxu0 0
    %621 = vmatpush1.bf16.msra.mxu0 0
    %622 = vmatprep.subr.bf16.mxu0 0
    %623 = vmatpush1.bf16.msra.mxu0 0
    %624 = vmatprep.subr.bf16.mxu0 0
    %625 = vmatpush1.bf16.msra.mxu0 0
    %626 = vmatprep.subr.bf16.mxu0 0
    %627 = vmatpush1.bf16.msra.mxu0 0
    %628 = vmatprep.subr.bf16.mxu0 0
    %629 = vmatpush1.bf16.msra.mxu0 0
    %630 = vmatprep.subr.bf16.mxu0 0
    %631 = vmatpush1.bf16.msra.mxu0 0
    %632 = vmatprep.subr.bf16.mxu0 0
    %633 = vmatpush1.bf16.msra.mxu0 0
    %634 = vmatprep.mubr.bf16.mxu0 0
    %635 = vmatmul.mubr.bf16.gmra.mrb[0].mxu0 %v526
    %v636 = vpop.f32.mrb[0].mxu0
    %v637 = vadd.f32 0.0, %v636
    %v638 = vpop.f32.mrb[0].mxu0
    %v639 = vpop.f32.mrb[0].mxu0
    %v640 = vpop.f32.mrb[0].mxu0
    %641 = vdwg.mxu0
    %v642 = vadd.f32 %v601, %v637
    %v643 = vxor.u32 %v642, 2147483648
    %v644 = vmul.f32 %v643, 1.442695
    %v645 = vpow.pop %v644
    %v646 = vadd.f32 %v645, 1.0
    %v647 = vrcp.pop %v646
    %v648 = vmul.f32 1.0, %v647
    %v649 = vmul.f32 %v648, 2.0
    %v650 = vsub.f32 %v649, 1.0
    %v651 = vmul.f32 %v648, %v467
    %653 = vrot.lane.b32.xlu0 %v650, 64
    %v654 = vpop.permute.xlu0 %653
    %v656 = vmul.f32 %v648, %v654
    %658 = vrot.lane.b32.xlu0 %v656, 32
    %v659 = vpop.permute.xlu0 %658
    %v661 = vadd.f32 %v651, %v659
    %v662 = vtanh.pop %v661
    %664 = vrot.lane.b32.xlu0 %v662, 64
    %v665 = vpop.permute.xlu0 %664
    %v667 = vmul.f32 %v648, %v665
    %v668 = vpack.c.bf16 %v667, %v667
    %v669 = vpack.c.bf16 %v593, %v593
    %671 = vrot.lane.b32.xlu0 %v669, 32
    %v672 = vpop.permute.xlu0 %671
    %v674 = vsel %vm182, %v672, 0
    %676 = vmatprep.subr.bf16.mxu0 0
    %677 = vmatpush1.bf16.msra.mxu0 %v266
    %678 = vmatprep.subr.bf16.mxu0 0
    %679 = vmatpush1.bf16.msra.mxu0 %v267
    %680 = vmatprep.subr.bf16.mxu0 0
    %681 = vmatpush1.bf16.msra.mxu0 0
    %682 = vmatprep.subr.bf16.mxu0 0
    %683 = vmatpush1.bf16.msra.mxu0 0
    %684 = vmatprep.subr.bf16.mxu0 0
    %685 = vmatpush1.bf16.msra.mxu0 0
    %686 = vmatprep.subr.bf16.mxu0 0
    %687 = vmatpush1.bf16.msra.mxu0 0
    %688 = vmatprep.subr.bf16.mxu0 0
    %689 = vmatpush1.bf16.msra.mxu0 0
    %690 = vmatprep.subr.bf16.mxu0 0
    %691 = vmatpush1.bf16.msra.mxu0 0
    %692 = vmatprep.subr.bf16.mxu0 0
    %693 = vmatpush1.bf16.msra.mxu0 0
    %694 = vmatprep.subr.bf16.mxu0 0
    %695 = vmatpush1.bf16.msra.mxu0 0
    %696 = vmatprep.subr.bf16.mxu0 0
    %697 = vmatpush1.bf16.msra.mxu0 0
    %698 = vmatprep.subr.bf16.mxu0 0
    %699 = vmatpush1.bf16.msra.mxu0 0
    %700 = vmatprep.subr.bf16.mxu0 0
    %701 = vmatpush1.bf16.msra.mxu0 0
    %702 = vmatprep.subr.bf16.mxu0 0
    %703 = vmatpush1.bf16.msra.mxu0 0
    %704 = vmatprep.subr.bf16.mxu0 0
    %705 = vmatpush1.bf16.msra.mxu0 0
    %706 = vmatprep.subr.bf16.mxu0 0
    %707 = vmatpush1.bf16.msra.mxu0 0
    %708 = vmatprep.mubr.bf16.mxu0 0
    %709 = vmatmul.mubr.bf16.gmra.mrb[0].mxu0 %v674
    %v710 = vpop.f32.mrb[0].mxu0
    %v711 = vadd.f32 0.0, %v710
    %v712 = vpop.f32.mrb[0].mxu0
    %v713 = vpop.f32.mrb[0].mxu0
    %v714 = vpop.f32.mrb[0].mxu0
    %715 = vdwg.mxu0
    %717 = vrot.lane.b32.xlu0 %v668, 32
    %v718 = vpop.permute.xlu0 %717
    %v720 = vsel %vm182, %v718, 0
    %722 = vmatprep.subr.bf16.mxu0 0
    %723 = vmatpush1.bf16.msra.mxu0 %v324
    %724 = vmatprep.subr.bf16.mxu0 0
    %725 = vmatpush1.bf16.msra.mxu0 %v325
    %726 = vmatprep.subr.bf16.mxu0 0
    %727 = vmatpush1.bf16.msra.mxu0 0
    %728 = vmatprep.subr.bf16.mxu0 0
    %729 = vmatpush1.bf16.msra.mxu0 0
    %730 = vmatprep.subr.bf16.mxu0 0
    %731 = vmatpush1.bf16.msra.mxu0 0
    %732 = vmatprep.subr.bf16.mxu0 0
    %733 = vmatpush1.bf16.msra.mxu0 0
    %734 = vmatprep.subr.bf16.mxu0 0
    %735 = vmatpush1.bf16.msra.mxu0 0
    %736 = vmatprep.subr.bf16.mxu0 0
    %737 = vmatpush1.bf16.msra.mxu0 0
    %738 = vmatprep.subr.bf16.mxu0 0
    %739 = vmatpush1.bf16.msra.mxu0 0
    %740 = vmatprep.subr.bf16.mxu0 0
    %741 = vmatpush1.bf16.msra.mxu0 0
    %742 = vmatprep.subr.bf16.mxu0 0
    %743 = vmatpush1.bf16.msra.mxu0 0
    %744 = vmatprep.subr.bf16.mxu0 0
    %745 = vmatpush1.bf16.msra.mxu0 0
    %746 = vmatprep.subr.bf16.mxu0 0
    %747 = vmatpush1.bf16.msra.mxu0 0
    %748 = vmatprep.subr.bf16.mxu0 0
    %749 = vmatpush1.bf16.msra.mxu0 0
    %750 = vmatprep.subr.bf16.mxu0 0
    %751 = vmatpush1.bf16.msra.mxu0 0
    %752 = vmatprep.subr.bf16.mxu0 0
    %753 = vmatpush1.bf16.msra.mxu0 0
    %754 = vmatprep.mubr.bf16.mxu0 0
    %755 = vmatmul.mubr.bf16.gmra.mrb[0].mxu0 %v720
    %v756 = vpop.f32.mrb[0].mxu0
    %v757 = vadd.f32 %v711, %v756
    %v758 = vpop.f32.mrb[0].mxu0
    %v759 = vpop.f32.mrb[0].mxu0
    %v760 = vpop.f32.mrb[0].mxu0
    %761 = vdwg.mxu0
    %v762 = vadd.f32 %v757, %v160
    %v763 = vxor.u32 %v762, 2147483648
    %v764 = vmul.f32 %v763, 1.442695
    %v765 = vpow.pop %v764
    %v766 = vadd.f32 %v765, 1.0
    %v767 = vrcp.pop %v766
    %v768 = vmul.f32 1.0, %v767
    %v769 = vmul.f32 %v768, 2.0
    %v770 = vsub.f32 %v769, 1.0
    %v771 = vmul.f32 %v768, %v587
    %773 = vrot.lane.b32.xlu0 %v770, 64
    %v774 = vpop.permute.xlu0 %773
    %v776 = vmul.f32 %v768, %v774
    %778 = vrot.lane.b32.xlu0 %v776, 32
    %v779 = vpop.permute.xlu0 %778
    %v781 = vadd.f32 %v771, %v779
    %v782 = vtanh.pop %v781
    %784 = vrot.lane.b32.xlu0 %v782, 64
    %v785 = vpop.permute.xlu0 %784
    %v787 = vmul.f32 %v768, %v785
    %789 = vrot.lane.b32.xlu0 %v787, 32
    %v790 = vpop.permute.xlu0 %789
    %s792 = scalar_lea.vmem [#allocation3], 16
    %793 = vst.msk [vmem:[%s792] sm:$0xff] %vm182, %v790
    %s794 = scalar_lea.vmem [#allocation2], 24
    %v795 = vld [vmem:[%s794] sm:$0xff]
    %796 = vmatprep.subr.bf16.mxu0 0
    %797 = vmatpush1.bf16.msra.mxu0 %v178
    %798 = vmatprep.subr.bf16.mxu0 0
    %799 = vmatpush1.bf16.msra.mxu0 %v179
    %800 = vmatprep.subr.bf16.mxu0 0
    %801 = vmatpush1.bf16.msra.mxu0 0
    %802 = vmatprep.subr.bf16.mxu0 0
    %803 = vmatpush1.bf16.msra.mxu0 0
    %804 = vmatprep.subr.bf16.mxu0 0
    %805 = vmatpush1.bf16.msra.mxu0 0
    %806 = vmatprep.subr.bf16.mxu0 0
    %807 = vmatpush1.bf16.msra.mxu0 0
    %808 = vmatprep.subr.bf16.mxu0 0
    %809 = vmatpush1.bf16.msra.mxu0 0
    %810 = vmatprep.subr.bf16.mxu0 0
    %811 = vmatpush1.bf16.msra.mxu0 0
    %812 = vmatprep.subr.bf16.mxu0 0
    %813 = vmatpush1.bf16.msra.mxu0 0
    %814 = vmatprep.subr.bf16.mxu0 0
    %815 = vmatpush1.bf16.msra.mxu0 0
    %816 = vmatprep.subr.bf16.mxu0 0
    %817 = vmatpush1.bf16.msra.mxu0 0
    %818 = vmatprep.subr.bf16.mxu0 0
    %819 = vmatpush1.bf16.msra.mxu0 0
    %820 = vmatprep.subr.bf16.mxu0 0
    %821 = vmatpush1.bf16.msra.mxu0 0
    %822 = vmatprep.subr.bf16.mxu0 0
    %823 = vmatpush1.bf16.msra.mxu0 0
    %824 = vmatprep.subr.bf16.mxu0 0
    %825 = vmatpush1.bf16.msra.mxu0 0
    %826 = vmatprep.subr.bf16.mxu0 0
    %827 = vmatpush1.bf16.msra.mxu0 0
    %828 = vmatprep.mubr.bf16.mxu0 0
    %829 = vmatmul.mubr.bf16.gmra.mrb[0].mxu0 %v720
    %v830 = vpop.f32.mrb[0].mxu0
    %v831 = vadd.f32 0.0, %v830
    %v832 = vpop.f32.mrb[0].mxu0
    %v833 = vpop.f32.mrb[0].mxu0
    %v834 = vpop.f32.mrb[0].mxu0
    %835 = vdwg.mxu0
    %v836 = vadd.f32 %v795, %v831
    %v837 = vxor.u32 %v836, 2147483648
    %v838 = vmul.f32 %v837, 1.442695
    %v839 = vpow.pop %v838
    %v840 = vadd.f32 %v839, 1.0
    %v841 = vrcp.pop %v840
    %v842 = vmul.f32 1.0, %v841
    %v843 = vmul.f32 %v842, 2.0
    %v844 = vsub.f32 %v843, 1.0
    %v845 = vmul.f32 %v842, %v661
    %847 = vrot.lane.b32.xlu0 %v844, 64
    %v848 = vpop.permute.xlu0 %847
    %v850 = vmul.f32 %v842, %v848
    %852 = vrot.lane.b32.xlu0 %v850, 32
    %v853 = vpop.permute.xlu0 %852
    %v855 = vadd.f32 %v845, %v853
    %v856 = vtanh.pop %v855
    %858 = vrot.lane.b32.xlu0 %v856, 64
    %v859 = vpop.permute.xlu0 %858
    %v861 = vmul.f32 %v842, %v859
    %v862 = vpack.c.bf16 %v861, %v861
    %v863 = vpack.c.bf16 %v787, %v787
    %865 = vrot.lane.b32.xlu0 %v863, 32
    %v866 = vpop.permute.xlu0 %865
    %v868 = vsel %vm182, %v866, 0
    %870 = vmatprep.subr.bf16.mxu0 0
    %871 = vmatpush1.bf16.msra.mxu0 %v266
    %872 = vmatprep.subr.bf16.mxu0 0
    %873 = vmatpush1.bf16.msra.mxu0 %v267
    %874 = vmatprep.subr.bf16.mxu0 0
    %875 = vmatpush1.bf16.msra.mxu0 0
    %876 = vmatprep.subr.bf16.mxu0 0
    %877 = vmatpush1.bf16.msra.mxu0 0
    %878 = vmatprep.subr.bf16.mxu0 0
    %879 = vmatpush1.bf16.msra.mxu0 0
    %880 = vmatprep.subr.bf16.mxu0 0
    %881 = vmatpush1.bf16.msra.mxu0 0
    %882 = vmatprep.subr.bf16.mxu0 0
    %883 = vmatpush1.bf16.msra.mxu0 0
    %884 = vmatprep.subr.bf16.mxu0 0
    %885 = vmatpush1.bf16.msra.mxu0 0
    %886 = vmatprep.subr.bf16.mxu0 0
    %887 = vmatpush1.bf16.msra.mxu0 0
    %888 = vmatprep.subr.bf16.mxu0 0
    %889 = vmatpush1.bf16.msra.mxu0 0
    %890 = vmatprep.subr.bf16.mxu0 0
    %891 = vmatpush1.bf16.msra.mxu0 0
    %892 = vmatprep.subr.bf16.mxu0 0
    %893 = vmatpush1.bf16.msra.mxu0 0
    %894 = vmatprep.subr.bf16.mxu0 0
    %895 = vmatpush1.bf16.msra.mxu0 0
    %896 = vmatprep.subr.bf16.mxu0 0
    %897 = vmatpush1.bf16.msra.mxu0 0
    %898 = vmatprep.subr.bf16.mxu0 0
    %899 = vmatpush1.bf16.msra.mxu0 0
    %900 = vmatprep.subr.bf16.mxu0 0
    %901 = vmatpush1.bf16.msra.mxu0 0
    %902 = vmatprep.mubr.bf16.mxu0 0
    %903 = vmatmul.mubr.bf16.gmra.mrb[0].mxu0 %v868
    %v904 = vpop.f32.mrb[0].mxu0
    %v905 = vadd.f32 0.0, %v904
    %v906 = vpop.f32.mrb[0].mxu0
    %v907 = vpop.f32.mrb[0].mxu0
    %v908 = vpop.f32.mrb[0].mxu0
    %909 = vdwg.mxu0
    %911 = vrot.lane.b32.xlu0 %v862, 32
    %v912 = vpop.permute.xlu0 %911
    %v914 = vsel %vm182, %v912, 0
    %916 = vmatprep.subr.bf16.mxu0 0
    %917 = vmatpush1.bf16.msra.mxu0 %v324
    %918 = vmatprep.subr.bf16.mxu0 0
    %919 = vmatpush1.bf16.msra.mxu0 %v325
    %920 = vmatprep.subr.bf16.mxu0 0
    %921 = vmatpush1.bf16.msra.mxu0 0
    %922 = vmatprep.subr.bf16.mxu0 0
    %923 = vmatpush1.bf16.msra.mxu0 0
    %924 = vmatprep.subr.bf16.mxu0 0
    %925 = vmatpush1.bf16.msra.mxu0 0
    %926 = vmatprep.subr.bf16.mxu0 0
    %927 = vmatpush1.bf16.msra.mxu0 0
    %928 = vmatprep.subr.bf16.mxu0 0
    %929 = vmatpush1.bf16.msra.mxu0 0
    %930 = vmatprep.subr.bf16.mxu0 0
    %931 = vmatpush1.bf16.msra.mxu0 0
    %932 = vmatprep.subr.bf16.mxu0 0
    %933 = vmatpush1.bf16.msra.mxu0 0
    %934 = vmatprep.subr.bf16.mxu0 0
    %935 = vmatpush1.bf16.msra.mxu0 0
    %936 = vmatprep.subr.bf16.mxu0 0
    %937 = vmatpush1.bf16.msra.mxu0 0
    %938 = vmatprep.subr.bf16.mxu0 0
    %939 = vmatpush1.bf16.msra.mxu0 0
    %940 = vmatprep.subr.bf16.mxu0 0
    %941 = vmatpush1.bf16.msra.mxu0 0
    %942 = vmatprep.subr.bf16.mxu0 0
    %943 = vmatpush1.bf16.msra.mxu0 0
    %944 = vmatprep.subr.bf16.mxu0 0
    %945 = vmatpush1.bf16.msra.mxu0 0
    %946 = vmatprep.subr.bf16.mxu0 0
    %947 = vmatpush1.bf16.msra.mxu0 0
    %948 = vmatprep.mubr.bf16.mxu0 0
    %949 = vmatmul.mubr.bf16.gmra.mrb[0].mxu0 %v914
    %v950 = vpop.f32.mrb[0].mxu0
    %v951 = vadd.f32 %v905, %v950
    %v952 = vpop.f32.mrb[0].mxu0
    %v953 = vpop.f32.mrb[0].mxu0
    %v954 = vpop.f32.mrb[0].mxu0
    %955 = vdwg.mxu0
    %v956 = vadd.f32 %v951, %v160
    %v957 = vxor.u32 %v956, 2147483648
    %v958 = vmul.f32 %v957, 1.442695
    %v959 = vpow.pop %v958
    %v960 = vadd.f32 %v959, 1.0
    %v961 = vrcp.pop %v960
    %v962 = vmul.f32 1.0, %v961
    %v963 = vmul.f32 %v962, 2.0
    %v964 = vsub.f32 %v963, 1.0
    %v965 = vmul.f32 %v962, %v781
    %967 = vrot.lane.b32.xlu0 %v964, 64
    %v968 = vpop.permute.xlu0 %967
    %v970 = vmul.f32 %v962, %v968
    %972 = vrot.lane.b32.xlu0 %v970, 32
    %v973 = vpop.permute.xlu0 %972
    %v975 = vadd.f32 %v965, %v973
    %v976 = vtanh.pop %v975
    %978 = vrot.lane.b32.xlu0 %v976, 64
    %v979 = vpop.permute.xlu0 %978
    %v981 = vmul.f32 %v962, %v979
    %983 = vrot.lane.b32.xlu0 %v981, 32
    %v984 = vpop.permute.xlu0 %983
    %s986 = scalar_lea.vmem [#allocation3], 24
    %987 = vst.msk [vmem:[%s986] sm:$0xff] %vm182, %v984
    %s988 = scalar_lea.vmem [#allocation2], 32
    %v989 = vld [vmem:[%s988] sm:$0xff]
    %990 = vmatprep.subr.bf16.mxu0 0
    %991 = vmatpush1.bf16.msra.mxu0 %v178
    %992 = vmatprep.subr.bf16.mxu0 0
    %993 = vmatpush1.bf16.msra.mxu0 %v179
    %994 = vmatprep.subr.bf16.mxu0 0
    %995 = vmatpush1.bf16.msra.mxu0 0
    %996 = vmatprep.subr.bf16.mxu0 0
    %997 = vmatpush1.bf16.msra.mxu0 0
    %998 = vmatprep.subr.bf16.mxu0 0
    %999 = vmatpush1.bf16.msra.mxu0 0
    %1000 = vmatprep.subr.bf16.mxu0 0
    %1001 = vmatpush1.bf16.msra.mxu0 0
    %1002 = vmatprep.subr.bf16.mxu0 0
    %1003 = vmatpush1.bf16.msra.mxu0 0
    %1004 = vmatprep.subr.bf16.mxu0 0
    %1005 = vmatpush1.bf16.msra.mxu0 0
    %1006 = vmatprep.subr.bf16.mxu0 0
    %1007 = vmatpush1.bf16.msra.mxu0 0
    %1008 = vmatprep.subr.bf16.mxu0 0
    %1009 = vmatpush1.bf16.msra.mxu0 0
    %1010 = vmatprep.subr.bf16.mxu0 0
    %1011 = vmatpush1.bf16.msra.mxu0 0
    %1012 = vmatprep.subr.bf16.mxu0 0
    %1013 = vmatpush1.bf16.msra.mxu0 0
    %1014 = vmatprep.subr.bf16.mxu0 0
    %1015 = vmatpush1.bf16.msra.mxu0 0
    %1016 = vmatprep.subr.bf16.mxu0 0
    %1017 = vmatpush1.bf16.msra.mxu0 0
    %1018 = vmatprep.subr.bf16.mxu0 0
    %1019 = vmatpush1.bf16.msra.mxu0 0
    %1020 = vmatprep.subr.bf16.mxu0 0
    %1021 = vmatpush1.bf16.msra.mxu0 0
    %1022 = vmatprep.mubr.bf16.mxu0 0
    %1023 = vmatmul.mubr.bf16.gmra.mrb[0].mxu0 %v914
    %v1024 = vpop.f32.mrb[0].mxu0
    %v1025 = vadd.f32 0.0, %v1024
    %v1026 = vpop.f32.mrb[0].mxu0
    %v1027 = vpop.f32.mrb[0].mxu0
    %v1028 = vpop.f32.mrb[0].mxu0
    %1029 = vdwg.mxu0
    %v1030 = vadd.f32 %v989, %v1025
    %v1031 = vxor.u32 %v1030, 2147483648
    %v1032 = vmul.f32 %v1031, 1.442695
    %v1033 = vpow.pop %v1032
    %v1034 = vadd.f32 %v1033, 1.0
    %v1035 = vrcp.pop %v1034
    %v1036 = vmul.f32 1.0, %v1035
    %v1037 = vmul.f32 %v1036, 2.0
    %v1038 = vsub.f32 %v1037, 1.0
    %v1039 = vmul.f32 %v1036, %v855
    %1041 = vrot.lane.b32.xlu0 %v1038, 64
    %v1042 = vpop.permute.xlu0 %1041
    %v1044 = vmul.f32 %v1036, %v1042
    %1046 = vrot.lane.b32.xlu0 %v1044, 32
    %v1047 = vpop.permute.xlu0 %1046
    %v1049 = vadd.f32 %v1039, %v1047
    %v1050 = vtanh.pop %v1049
    %1052 = vrot.lane.b32.xlu0 %v1050, 64
    %v1053 = vpop.permute.xlu0 %1052
    %v1055 = vmul.f32 %v1036, %v1053
    %v1056 = vpack.c.bf16 %v1055, %v1055
    %v1057 = vpack.c.bf16 %v981, %v981
    %1059 = vrot.lane.b32.xlu0 %v1057, 32
    %v1060 = vpop.permute.xlu0 %1059
    %v1062 = vsel %vm182, %v1060, 0
    %1064 = vmatprep.subr.bf16.mxu0 0
    %1065 = vmatpush1.bf16.msra.mxu0 %v266
    %1066 = vmatprep.subr.bf16.mxu0 0
    %1067 = vmatpush1.bf16.msra.mxu0 %v267
    %1068 = vmatprep.subr.bf16.mxu0 0
    %1069 = vmatpush1.bf16.msra.mxu0 0
    %1070 = vmatprep.subr.bf16.mxu0 0
    %1071 = vmatpush1.bf16.msra.mxu0 0
    %1072 = vmatprep.subr.bf16.mxu0 0
    %1073 = vmatpush1.bf16.msra.mxu0 0
    %1074 = vmatprep.subr.bf16.mxu0 0
    %1075 = vmatpush1.bf16.msra.mxu0 0
    %1076 = vmatprep.subr.bf16.mxu0 0
    %1077 = vmatpush1.bf16.msra.mxu0 0
    %1078 = vmatprep.subr.bf16.mxu0 0
    %1079 = vmatpush1.bf16.msra.mxu0 0
    %1080 = vmatprep.subr.bf16.mxu0 0
    %1081 = vmatpush1.bf16.msra.mxu0 0
    %1082 = vmatprep.subr.bf16.mxu0 0
    %1083 = vmatpush1.bf16.msra.mxu0 0
    %1084 = vmatprep.subr.bf16.mxu0 0
    %1085 = vmatpush1.bf16.msra.mxu0 0
    %1086 = vmatprep.subr.bf16.mxu0 0
    %1087 = vmatpush1.bf16.msra.mxu0 0
    %1088 = vmatprep.subr.bf16.mxu0 0
    %1089 = vmatpush1.bf16.msra.mxu0 0
    %1090 = vmatprep.subr.bf16.mxu0 0
    %1091 = vmatpush1.bf16.msra.mxu0 0
    %1092 = vmatprep.subr.bf16.mxu0 0
    %1093 = vmatpush1.bf16.msra.mxu0 0
    %1094 = vmatprep.subr.bf16.mxu0 0
    %1095 = vmatpush1.bf16.msra.mxu0 0
    %1096 = vmatprep.mubr.bf16.mxu0 0
    %1097 = vmatmul.mubr.bf16.gmra.mrb[0].mxu0 %v1062
    %v1098 = vpop.f32.mrb[0].mxu0
    %v1099 = vadd.f32 0.0, %v1098
    %v1100 = vpop.f32.mrb[0].mxu0
    %v1101 = vpop.f32.mrb[0].mxu0
    %v1102 = vpop.f32.mrb[0].mxu0
    %1103 = vdwg.mxu0
    %1105 = vrot.lane.b32.xlu0 %v1056, 32
    %v1106 = vpop.permute.xlu0 %1105
    %v1108 = vsel %vm182, %v1106, 0
    %1110 = vmatprep.subr.bf16.mxu0 0
    %1111 = vmatpush1.bf16.msra.mxu0 %v324
    %1112 = vmatprep.subr.bf16.mxu0 0
    %1113 = vmatpush1.bf16.msra.mxu0 %v325
    %1114 = vmatprep.subr.bf16.mxu0 0
    %1115 = vmatpush1.bf16.msra.mxu0 0
    %1116 = vmatprep.subr.bf16.mxu0 0
    %1117 = vmatpush1.bf16.msra.mxu0 0
    %1118 = vmatprep.subr.bf16.mxu0 0
    %1119 = vmatpush1.bf16.msra.mxu0 0
    %1120 = vmatprep.subr.bf16.mxu0 0
    %1121 = vmatpush1.bf16.msra.mxu0 0
    %1122 = vmatprep.subr.bf16.mxu0 0
    %1123 = vmatpush1.bf16.msra.mxu0 0
    %1124 = vmatprep.subr.bf16.mxu0 0
    %1125 = vmatpush1.bf16.msra.mxu0 0
    %1126 = vmatprep.subr.bf16.mxu0 0
    %1127 = vmatpush1.bf16.msra.mxu0 0
    %1128 = vmatprep.subr.bf16.mxu0 0
    %1129 = vmatpush1.bf16.msra.mxu0 0
    %1130 = vmatprep.subr.bf16.mxu0 0
    %1131 = vmatpush1.bf16.msra.mxu0 0
    %1132 = vmatprep.subr.bf16.mxu0 0
    %1133 = vmatpush1.bf16.msra.mxu0 0
    %1134 = vmatprep.subr.bf16.mxu0 0
    %1135 = vmatpush1.bf16.msra.mxu0 0
    %1136 = vmatprep.subr.bf16.mxu0 0
    %1137 = vmatpush1.bf16.msra.mxu0 0
    %1138 = vmatprep.subr.bf16.mxu0 0
    %1139 = vmatpush1.bf16.msra.mxu0 0
    %1140 = vmatprep.subr.bf16.mxu0 0
    %1141 = vmatpush1.bf16.msra.mxu0 0
    %1142 = vmatprep.mubr.bf16.mxu0 0
    %1143 = vmatmul.mubr.bf16.gmra.mrb[0].mxu0 %v1108
    %v1144 = vpop.f32.mrb[0].mxu0
    %v1145 = vadd.f32 %v1099, %v1144
    %v1146 = vpop.f32.mrb[0].mxu0
    %v1147 = vpop.f32.mrb[0].mxu0
    %v1148 = vpop.f32.mrb[0].mxu0
    %1149 = vdwg.mxu0
    %v1150 = vadd.f32 %v1145, %v160
    %v1151 = vxor.u32 %v1150, 2147483648
    %v1152 = vmul.f32 %v1151, 1.442695
    %v1153 = vpow.pop %v1152
    %v1154 = vadd.f32 %v1153, 1.0
    %v1155 = vrcp.pop %v1154
    %v1156 = vmul.f32 1.0, %v1155
    %v1157 = vmul.f32 %v1156, 2.0
    %v1158 = vsub.f32 %v1157, 1.0
    %v1159 = vmul.f32 %v1156, %v975
    %1161 = vrot.lane.b32.xlu0 %v1158, 64
    %v1162 = vpop.permute.xlu0 %1161
    %v1164 = vmul.f32 %v1156, %v1162
    %1166 = vrot.lane.b32.xlu0 %v1164, 32
    %v1167 = vpop.permute.xlu0 %1166
    %v1169 = vadd.f32 %v1159, %v1167
    %v1170 = vtanh.pop %v1169
    %1172 = vrot.lane.b32.xlu0 %v1170, 64
    %v1173 = vpop.permute.xlu0 %1172
    %v1175 = vmul.f32 %v1156, %v1173
    %1177 = vrot.lane.b32.xlu0 %v1175, 32
    %v1178 = vpop.permute.xlu0 %1177
    %s1180 = scalar_lea.vmem [#allocation3], 32
    %1181 = vst.msk [vmem:[%s1180] sm:$0xff] %vm182, %v1178
    %s1182 = scalar_lea.vmem [#allocation2], 40
    %v1183 = vld [vmem:[%s1182] sm:$0xff]
    %1184 = vmatprep.subr.bf16.mxu0 0
    %1185 = vmatpush1.bf16.msra.mxu0 %v178
    %1186 = vmatprep.subr.bf16.mxu0 0
    %1187 = vmatpush1.bf16.msra.mxu0 %v179
    %1188 = vmatprep.subr.bf16.mxu0 0
    %1189 = vmatpush1.bf16.msra.mxu0 0
    %1190 = vmatprep.subr.bf16.mxu0 0
    %1191 = vmatpush1.bf16.msra.mxu0 0
    %1192 = vmatprep.subr.bf16.mxu0 0
    %1193 = vmatpush1.bf16.msra.mxu0 0
    %1194 = vmatprep.subr.bf16.mxu0 0
    %1195 = vmatpush1.bf16.msra.mxu0 0
    %1196 = vmatprep.subr.bf16.mxu0 0
    %1197 = vmatpush1.bf16.msra.mxu0 0
    %1198 = vmatprep.subr.bf16.mxu0 0
    %1199 = vmatpush1.bf16.msra.mxu0 0
    %1200 = vmatprep.subr.bf16.mxu0 0
    %1201 = vmatpush1.bf16.msra.mxu0 0
    %1202 = vmatprep.subr.bf16.mxu0 0
    %1203 = vmatpush1.bf16.msra.mxu0 0
    %1204 = vmatprep.subr.bf16.mxu0 0
    %1205 = vmatpush1.bf16.msra.mxu0 0
    %1206 = vmatprep.subr.bf16.mxu0 0
    %1207 = vmatpush1.bf16.msra.mxu0 0
    %1208 = vmatprep.subr.bf16.mxu0 0
    %1209 = vmatpush1.bf16.msra.mxu0 0
    %1210 = vmatprep.subr.bf16.mxu0 0
    %1211 = vmatpush1.bf16.msra.mxu0 0
    %1212 = vmatprep.subr.bf16.mxu0 0
    %1213 = vmatpush1.bf16.msra.mxu0 0
    %1214 = vmatprep.subr.bf16.mxu0 0
    %1215 = vmatpush1.bf16.msra.mxu0 0
    %1216 = vmatprep.mubr.bf16.mxu0 0
    %1217 = vmatmul.mubr.bf16.gmra.mrb[0].mxu0 %v1108
    %v1218 = vpop.f32.mrb[0].mxu0
    %v1219 = vadd.f32 0.0, %v1218
    %v1220 = vpop.f32.mrb[0].mxu0
    %v1221 = vpop.f32.mrb[0].mxu0
    %v1222 = vpop.f32.mrb[0].mxu0
    %1223 = vdwg.mxu0
    %v1224 = vadd.f32 %v1183, %v1219
    %v1225 = vxor.u32 %v1224, 2147483648
    %v1226 = vmul.f32 %v1225, 1.442695
    %v1227 = vpow.pop %v1226
    %v1228 = vadd.f32 %v1227, 1.0
    %v1229 = vrcp.pop %v1228
    %v1230 = vmul.f32 1.0, %v1229
    %v1231 = vmul.f32 %v1230, 2.0
    %v1232 = vsub.f32 %v1231, 1.0
    %v1233 = vmul.f32 %v1230, %v1049
    %1235 = vrot.lane.b32.xlu0 %v1232, 64
    %v1236 = vpop.permute.xlu0 %1235
    %v1238 = vmul.f32 %v1230, %v1236
    %1240 = vrot.lane.b32.xlu0 %v1238, 32
    %v1241 = vpop.permute.xlu0 %1240
    %v1243 = vadd.f32 %v1233, %v1241
    %v1244 = vtanh.pop %v1243
    %1246 = vrot.lane.b32.xlu0 %v1244, 64
    %v1247 = vpop.permute.xlu0 %1246
    %v1249 = vmul.f32 %v1230, %v1247
    %v1250 = vpack.c.bf16 %v1249, %v1249
    %v1251 = vpack.c.bf16 %v1175, %v1175
    %1253 = vrot.lane.b32.xlu0 %v1251, 32
    %v1254 = vpop.permute.xlu0 %1253
    %v1256 = vsel %vm182, %v1254, 0
    %1258 = vmatprep.subr.bf16.mxu0 0
    %1259 = vmatpush1.bf16.msra.mxu0 %v266
    %1260 = vmatprep.subr.bf16.mxu0 0
    %1261 = vmatpush1.bf16.msra.mxu0 %v267
    %1262 = vmatprep.subr.bf16.mxu0 0
    %1263 = vmatpush1.bf16.msra.mxu0 0
    %1264 = vmatprep.subr.bf16.mxu0 0
    %1265 = vmatpush1.bf16.msra.mxu0 0
    %1266 = vmatprep.subr.bf16.mxu0 0
    %1267 = vmatpush1.bf16.msra.mxu0 0
    %1268 = vmatprep.subr.bf16.mxu0 0
    %1269 = vmatpush1.bf16.msra.mxu0 0
    %1270 = vmatprep.subr.bf16.mxu0 0
    %1271 = vmatpush1.bf16.msra.mxu0 0
    %1272 = vmatprep.subr.bf16.mxu0 0
    %1273 = vmatpush1.bf16.msra.mxu0 0
    %1274 = vmatprep.subr.bf16.mxu0 0
    %1275 = vmatpush1.bf16.msra.mxu0 0
    %1276 = vmatprep.subr.bf16.mxu0 0
    %1277 = vmatpush1.bf16.msra.mxu0 0
    %1278 = vmatprep.subr.bf16.mxu0 0
    %1279 = vmatpush1.bf16.msra.mxu0 0
    %1280 = vmatprep.subr.bf16.mxu0 0
    %1281 = vmatpush1.bf16.msra.mxu0 0
    %1282 = vmatprep.subr.bf16.mxu0 0
    %1283 = vmatpush1.bf16.msra.mxu0 0
    %1284 = vmatprep.subr.bf16.mxu0 0
    %1285 = vmatpush1.bf16.msra.mxu0 0
    %1286 = vmatprep.subr.bf16.mxu0 0
    %1287 = vmatpush1.bf16.msra.mxu0 0
    %1288 = vmatprep.subr.bf16.mxu0 0
    %1289 = vmatpush1.bf16.msra.mxu0 0
    %1290 = vmatprep.mubr.bf16.mxu0 0
    %1291 = vmatmul.mubr.bf16.gmra.mrb[0].mxu0 %v1256
    %v1292 = vpop.f32.mrb[0].mxu0
    %v1293 = vadd.f32 0.0, %v1292
    %v1294 = vpop.f32.mrb[0].mxu0
    %v1295 = vpop.f32.mrb[0].mxu0
    %v1296 = vpop.f32.mrb[0].mxu0
    %1297 = vdwg.mxu0
    %1299 = vrot.lane.b32.xlu0 %v1250, 32
    %v1300 = vpop.permute.xlu0 %1299
    %v1302 = vsel %vm182, %v1300, 0
    %1304 = vmatprep.subr.bf16.mxu0 0
    %1305 = vmatpush1.bf16.msra.mxu0 %v324
    %1306 = vmatprep.subr.bf16.mxu0 0
    %1307 = vmatpush1.bf16.msra.mxu0 %v325
    %1308 = vmatprep.subr.bf16.mxu0 0
    %1309 = vmatpush1.bf16.msra.mxu0 0
    %1310 = vmatprep.subr.bf16.mxu0 0
    %1311 = vmatpush1.bf16.msra.mxu0 0
    %1312 = vmatprep.subr.bf16.mxu0 0
    %1313 = vmatpush1.bf16.msra.mxu0 0
    %1314 = vmatprep.subr.bf16.mxu0 0
    %1315 = vmatpush1.bf16.msra.mxu0 0
    %1316 = vmatprep.subr.bf16.mxu0 0
    %1317 = vmatpush1.bf16.msra.mxu0 0
    %1318 = vmatprep.subr.bf16.mxu0 0
    %1319 = vmatpush1.bf16.msra.mxu0 0
    %1320 = vmatprep.subr.bf16.mxu0 0
    %1321 = vmatpush1.bf16.msra.mxu0 0
    %1322 = vmatprep.subr.bf16.mxu0 0
    %1323 = vmatpush1.bf16.msra.mxu0 0
    %1324 = vmatprep.subr.bf16.mxu0 0
    %1325 = vmatpush1.bf16.msra.mxu0 0
    %1326 = vmatprep.subr.bf16.mxu0 0
    %1327 = vmatpush1.bf16.msra.mxu0 0
    %1328 = vmatprep.subr.bf16.mxu0 0
    %1329 = vmatpush1.bf16.msra.mxu0 0
    %1330 = vmatprep.subr.bf16.mxu0 0
    %1331 = vmatpush1.bf16.msra.mxu0 0
    %1332 = vmatprep.subr.bf16.mxu0 0
    %1333 = vmatpush1.bf16.msra.mxu0 0
    %1334 = vmatprep.subr.bf16.mxu0 0
    %1335 = vmatpush1.bf16.msra.mxu0 0
    %1336 = vmatprep.mubr.bf16.mxu0 0
    %1337 = vmatmul.mubr.bf16.gmra.mrb[0].mxu0 %v1302
    %v1338 = vpop.f32.mrb[0].mxu0
    %v1339 = vadd.f32 %v1293, %v1338
    %v1340 = vpop.f32.mrb[0].mxu0
    %v1341 = vpop.f32.mrb[0].mxu0
    %v1342 = vpop.f32.mrb[0].mxu0
    %1343 = vdwg.mxu0
    %v1344 = vadd.f32 %v1339, %v160
    %v1345 = vxor.u32 %v1344, 2147483648
    %v1346 = vmul.f32 %v1345, 1.442695
    %v1347 = vpow.pop %v1346
    %v1348 = vadd.f32 %v1347, 1.0
    %v1349 = vrcp.pop %v1348
    %v1350 = vmul.f32 1.0, %v1349
    %v1351 = vmul.f32 %v1350, 2.0
    %v1352 = vsub.f32 %v1351, 1.0
    %v1353 = vmul.f32 %v1350, %v1169
    %1355 = vrot.lane.b32.xlu0 %v1352, 64
    %v1356 = vpop.permute.xlu0 %1355
    %v1358 = vmul.f32 %v1350, %v1356
    %1360 = vrot.lane.b32.xlu0 %v1358, 32
    %v1361 = vpop.permute.xlu0 %1360
    %v1363 = vadd.f32 %v1353, %v1361
    %v1364 = vtanh.pop %v1363
    %1366 = vrot.lane.b32.xlu0 %v1364, 64
    %v1367 = vpop.permute.xlu0 %1366
    %v1369 = vmul.f32 %v1350, %v1367
    %1371 = vrot.lane.b32.xlu0 %v1369, 32
    %v1372 = vpop.permute.xlu0 %1371
    %s1374 = scalar_lea.vmem [#allocation3], 40
    %1375 = vst.msk [vmem:[%s1374] sm:$0xff] %vm182, %v1372
    // Predicated region
    $region38: #{decoder_forward.1} parent=1 // pred_check
      _
    $region39: #{decoder_forward.1} parent=1 // pred_check_branch
      %1377 = sbr.rel (0) target = $region41
    $region40: #{decoder_forward.1} parent=1 // pred_region
      %s1379 = ssub.s32 768, 768
      %1380 = vsyncadd [#allocation4], %s1379
      %s1381 = sshll.u32 [#allocation3], 4
      %s1382 = int_to_ptr.vmem [resolvable:$true] %s1381
      %1387 = dma.vmem_to_hbm [thread:$0]  %s1382, 768, %s9, [#allocation4], 128, 128, 8
    $region41: #{decoder_forward.1} parent=1 // pred_fallthru
      _
    // Predicated region
    $region42: #{decoder_forward.1} parent=1 // pred_check
      _
    $region43: #{decoder_forward.1} parent=1 // pred_check_branch
      %1389 = sbr.rel (0) target = $region45
    $region44: #{decoder_forward.1} parent=1 // pred_region
      %1390 = dma.done [#allocation4], 768
    $region45: #{decoder_forward.1} parent=1 // pred_fallthru
      _
    %1391 = vsyncpa [#allocation4], 1

</llo_original>
